<compile_context>
chip_gen: v5e
topology: v5e:2x2
jax: 0.10.0
libtpu: 0.0.40
codegen_flags: <defaults>
</compile_context>

<pallas_src>
import jax
import jax.numpy as jnp
from jax.experimental import pallas as pl
from jax.experimental.pallas import tpu as pltpu

BN_EPS = 1e-5
_FALLBACK_VMEM_LIMIT = 48 * 1024 * 1024


def _vmem_limit_bytes():
    """~75% of physical VMEM per core; falls back to 48 MiB if the query is unavailable."""
    try:
        cap = int(pltpu.get_tpu_info().vmem_capacity_bytes)
        return max(_FALLBACK_VMEM_LIMIT, (cap * 3) // 4)
    except Exception:
        return _FALLBACK_VMEM_LIMIT


# ----------------------------------------------------------------------------- in-kernel helpers

def _pad_hw(x):
    """Zero-pad (H, W, C) -> (H+2, W+2, C) as a value (two concats; no scratch, no partial stores)."""
    H, W, C = x.shape
    zc = jnp.zeros((H, 1, C), x.dtype)
    x = jnp.concatenate([zc, x, zc], axis=1)
    zr = jnp.zeros((1, W + 2, C), x.dtype)
    return jnp.concatenate([zr, x, zr], axis=0)


def _conv3x3_im2col(xpad, w_ref):
    """3x3 'same' conv as ONE GEMM.

    xpad: (H+2, W+2, Cin) bf16 value; w_ref: (9*Cin, Cout) bf16 ref (host-reshaped, (ky,kx,cin) order).
    Returns (H*W, Cout) f32 accumulator.
    """
    Hp, Wp, Cin = xpad.shape
    H, W = Hp - 2, Wp - 2
    taps = [xpad[ky:ky + H, kx:kx + W, :].reshape(H * W, Cin)
            for ky in range(3) for kx in range(3)]
    tapmat = jnp.concatenate(taps, axis=-1)                      # (H*W, 9*Cin) bf16
    return jnp.dot(tapmat, w_ref[...], preferred_element_type=jnp.float32)


def _emit_stats(st_ref, acc):
    """Per-block centered BN statistics: row 0 = mean, row 1 = M2 = sum((x-mean)^2).

    Reductions ride the MXU (ones @ acc) — essentially free filler next to the conv GEMM.
    """
    M = acc.shape[0]
    ones_row = jnp.ones((1, M), jnp.float32)
    mean = jnp.dot(ones_row, acc, preferred_element_type=jnp.float32) * (1.0 / M)   # (1, C)
    d = acc - mean
    m2 = jnp.dot(ones_row, d * d, preferred_element_type=jnp.float32)               # (1, C)
    st_ref[:, 0:1, :] = mean[None]
    st_ref[:, 1:2, :] = m2[None]


# ----------------------------------------------------------------------------- kernels

def _conv1_kernel(x_ref, w1_ref, y1_ref, st1_ref):
    # conv bias omitted: it cancels exactly under the training-mode batch-mean subtraction.
    _, H, W, Cin = x_ref.shape
    Cout = y1_ref.shape[-1]
    xpad = _pad_hw(x_ref[...].reshape(H, W, Cin))                # bf16
    acc = _conv3x3_im2col(xpad, w1_ref)                          # (H*W, Cout) f32
    y1_ref[...] = acc.reshape(1, H, W, Cout).astype(y1_ref.dtype)   # bf16 inter-phase activation
    _emit_stats(st1_ref, acc)


def _bn1_relu_conv2_pool_kernel(y1_ref, s1_ref, t1_ref, w2_ref,
                                st2_ref, pmax_ref, pmin_ref, y2_scr):
    _, H, W, C = y1_ref.shape
    Cout = pmax_ref.shape[-1]
    # BN1 folded to one FMA + ReLU, single cast to bf16 feeding the conv2 GEMM.
    a1 = jnp.maximum(y1_ref[...].astype(jnp.float32) * s1_ref[...] + t1_ref[...], 0.0)
    apad = _pad_hw(a1.reshape(H, W, C).astype(jnp.bfloat16))
    acc = _conv3x3_im2col(apad, w2_ref)                          # (H*W, Cout) f32, pre-BN conv2 output
    _emit_stats(st2_ref, acc)

    # Dual (max, min) 2x2/2 pooling of the PRE-BN conv2 output: only quarter-res tensors leave VMEM.
    y2_scr[...] = acc.reshape(H, W, Cout)
    Ho, Wo = H // 2, W // 2
    p00 = y2_scr[pl.ds(0, Ho, 2), pl.ds(0, Wo, 2), :]
    p01 = y2_scr[pl.ds(0, Ho, 2), pl.ds(1, Wo, 2), :]
    p10 = y2_scr[pl.ds(1, Ho, 2), pl.ds(0, Wo, 2), :]
    p11 = y2_scr[pl.ds(1, Ho, 2), pl.ds(1, Wo, 2), :]
    pmax_ref[...] = jnp.maximum(jnp.maximum(p00, p01),
                                jnp.maximum(p10, p11)).reshape(1, Ho, Wo, Cout)
    pmin_ref[...] = jnp.minimum(jnp.minimum(p00, p01),
                                jnp.minimum(p10, p11)).reshape(1, Ho, Wo, Cout)


# ----------------------------------------------------------------------------- host-side glue

def _fold_bn(stats, per_block_count, gamma, beta):
    """Combine per-block (mean, M2) with Chan's formula -> folded BN scale/shift, shaped (1,1,1,C)."""
    means = stats[:, 0, :]                                       # (N, C)
    m2s = stats[:, 1, :]                                         # (N, C)
    nblk = stats.shape[0]
    gmean = jnp.mean(means, axis=0)                              # equal-count blocks
    m2 = jnp.sum(m2s, axis=0) + per_block_count * jnp.sum((means - gmean) ** 2, axis=0)
    var = jnp.maximum(m2, 0.0) / (per_block_count * nblk)        # biased variance (training-mode BN)
    scale = gamma * jax.lax.rsqrt(var + BN_EPS)
    shift = beta - gmean * scale
    r = lambda v: v.reshape(1, 1, 1, -1).astype(jnp.float32)
    return r(scale), r(shift)


def init_params(key, in_channel, out_channel):
    """Deterministic synthetic params, shapes match nn.Conv2d / nn.BatchNorm2d."""
    k1, k2, k3, k4 = jax.random.split(key, 4)
    s1 = 1.0 / jnp.sqrt(in_channel * 9.0)
    s2 = 1.0 / jnp.sqrt(out_channel * 9.0)
    return {
        # conv weights in HWIO layout (kh, kw, Cin, Cout)
        'w1': jax.random.normal(k1, (3, 3, in_channel, out_channel), jnp.float32) * s1,
        'b1': jax.random.normal(k2, (out_channel,), jnp.float32) * s1,
        'g1': jnp.ones((out_channel,), jnp.float32),
        'be1': jnp.zeros((out_channel,), jnp.float32),
        'w2': jax.random.normal(k3, (3, 3, out_channel, out_channel), jnp.float32) * s2,
        'b2': jax.random.normal(k4, (out_channel,), jnp.float32) * s2,
        'g2': jnp.ones((out_channel,), jnp.float32),
        'be2': jnp.zeros((out_channel,), jnp.float32),
    }


def down_path_forward(x_nchw, params):
    """x_nchw: (N, Cin, H, W)  ->  (N, Cout, H//2, W//2), matching PyTorch."""
    x = jnp.transpose(x_nchw, (0, 2, 3, 1)).astype(jnp.bfloat16)     # NHWC, bf16 on the conv input path
    N, H, W, Cin = x.shape
    Cout = params['w1'].shape[-1]
    assert H % 2 == 0 and W % 2 == 0, "MaxPool2d(2) expects even spatial dims"

    # Weights reshaped once on the host for the im2col GEMM: (ky, kx, cin) -> K axis.
    w1 = params['w1'].astype(jnp.bfloat16).reshape(9 * Cin, Cout)
    w2 = params['w2'].astype(jnp.bfloat16).reshape(9 * Cout, Cout)
    # NOTE: conv biases b1/b2 are intentionally unused: they cancel under training-mode BatchNorm.

    grid = (N,)
    cparams = pltpu.CompilerParams(
        dimension_semantics=("parallel",),            # batch axis -> both TCs on v7x, pipelined elsewhere
        vmem_limit_bytes=_vmem_limit_bytes(),
    )
    # TODO(synk): add a row-block grid axis with a 1-row halo for realistic UNet resolutions (v7x VMEM).

    act_in_spec = pl.BlockSpec((1, H, W, Cin), lambda n: (n, 0, 0, 0))
    act_mid_spec = pl.BlockSpec((1, H, W, Cout), lambda n: (n, 0, 0, 0))
    stat_spec = pl.BlockSpec((1, 2, Cout), lambda n: (n, 0, 0))
    chan_spec = pl.BlockSpec((1, 1, 1, Cout), lambda n: (0, 0, 0, 0))
    w1_spec = pl.BlockSpec((9 * Cin, Cout), lambda n: (0, 0))
    w2_spec = pl.BlockSpec((9 * Cout, Cout), lambda n: (0, 0))
    pool_spec = pl.BlockSpec((1, H // 2, W // 2, Cout), lambda n: (n, 0, 0, 0))

    # ---- phase 1: conv1 (im2col GEMM) + per-sample centered BN1 stats --------
    y1, st1 = pl.pallas_call(
        _conv1_kernel,
        grid=grid,
        in_specs=[act_in_spec, w1_spec],
        out_specs=[act_mid_spec, stat_spec],
        out_shape=[jax.ShapeDtypeStruct((N, H, W, Cout), jnp.bfloat16),
                   jax.ShapeDtypeStruct((N, 2, Cout), jnp.float32)],
        compiler_params=cparams,
    )(x, w1)

    s1, t1 = _fold_bn(st1, H * W, params['g1'], params['be1'])

    # ---- phase 2: BN1+ReLU -> conv2 (im2col GEMM) + BN2 stats + dual pooling --
    st2, pmax, pmin = pl.pallas_call(
        _bn1_relu_conv2_pool_kernel,
        grid=grid,
        in_specs=[act_mid_spec, chan_spec, chan_spec, w2_spec],
        out_specs=[stat_spec, pool_spec, pool_spec],
        out_shape=[jax.ShapeDtypeStruct((N, 2, Cout), jnp.float32),
                   jax.ShapeDtypeStruct((N, H // 2, W // 2, Cout), jnp.float32),
                   jax.ShapeDtypeStruct((N, H // 2, W // 2, Cout), jnp.float32)],
        scratch_shapes=[pltpu.VMEM((H, W, Cout), jnp.float32)],
        compiler_params=cparams,
    )(y1, s1, t1, w2)

    s2, t2 = _fold_bn(st2, H * W, params['g2'], params['be2'])

    # ---- finalize (quarter-resolution, pure elementwise -> XLA glue) ----------
    # relu(max_w(s*x + t)) == relu(s*max_w(x) + t) for s>=0 and relu(s*min_w(x) + t) for s<0.
    sel = jnp.where(s2 >= 0.0, pmax, pmin)
    out_nhwc = jnp.maximum(sel * s2 + t2, 0.0)
    return jnp.transpose(out_nhwc, (0, 3, 1, 2))                     # back to NCHW


# ----------------------------------------------------------------------------- reference & test

def _reference_forward(x_nchw, params):
    """Pure-JAX reference (NCHW, f32 lax.conv, with conv biases) for validation."""
    def conv(x, w_hwio, b):
        w_oihw = jnp.transpose(w_hwio, (3, 2, 0, 1))
        y = jax.lax.conv_general_dilated(
            x, w_oihw, window_strides=(1, 1), padding=((1, 1), (1, 1)),
            dimension_numbers=('NCHW', 'OIHW', 'NCHW'))
        return y + b.reshape(1, -1, 1, 1)

    def bn_relu(y, g, be):
        m = jnp.mean(y, axis=(0, 2, 3), keepdims=True)
        v = jnp.mean((y - m) ** 2, axis=(0, 2, 3), keepdims=True)
        y = (y - m) * jax.lax.rsqrt(v + BN_EPS) * g.reshape(1, -1, 1, 1) + be.reshape(1, -1, 1, 1)
        return jnp.maximum(y, 0.0)

    y = bn_relu(conv(x_nchw, params['w1'], params['b1']), params['g1'], params['be1'])
    y = bn_relu(conv(y, params['w2'], params['b2']), params['g2'], params['be2'])
    N, C, H, W = y.shape
    return jnp.max(y.reshape(N, C, H // 2, 2, W // 2, 2), axis=(3, 5))


if __name__ == "__main__":
    key = jax.random.PRNGKey(0)
    kx, kp = jax.random.split(key)

    N, Cin, Cout, H, W = 2, 4, 8, 16, 16
    x = jax.random.normal(kx, (N, Cin, H, W), jnp.float32)
    params = init_params(kp, Cin, Cout)

    out = jax.block_until_ready(down_path_forward(x, params))
    ref = jax.block_until_ready(_reference_forward(x, params))

    assert out.shape == (N, Cout, H // 2, W // 2), out.shape
    err = float(jnp.max(jnp.abs(out - ref)))
    # bf16 MXU operands + bf16 inter-phase activation vs the all-f32 reference -> loosened tolerance.
    assert jnp.allclose(out, ref, atol=5e-2, rtol=5e-2), f"max abs err {err}"

    print("KERNEL_OK")
</pallas_src>

<mosaic_0001>
module attributes {stable_mosaic.version = 11 : i64} {
  func.func @_conv1_kernel(%arg0: i32, %arg1: memref<1x16x16x4xbf16, #tpu.memory_space<vmem>>, %arg2: memref<36x8xbf16, #tpu.memory_space<vmem>>, %arg3: memref<1x16x16x8xbf16, #tpu.memory_space<vmem>>, %arg4: memref<1x2x8xf32, #tpu.memory_space<vmem>>) attributes {dimension_semantics = [#tpu.dimension_semantics<parallel>], iteration_bounds = array<i64: 2>, scalar_prefetch = 0 : i64, scratch_operands = 0 : i64, tpu.core_type = #tpu.core_type<tc>, window_params = [{transform_indices = @transform_0, window_bounds = array<i64: 1, 16, 16, 4>}, {pipeline_mode = #tpu.pipeline_mode<synchronous>, transform_indices = @transform_1, window_bounds = array<i64: 36, 8>}, {transform_indices = @transform_2, window_bounds = array<i64: 1, 16, 16, 8>}, {transform_indices = @transform_3, window_bounds = array<i64: 1, 2, 8>}]} {
    %c0 = arith.constant 0 : index
    %c0_0 = arith.constant 0 : index
    %c0_1 = arith.constant 0 : index
    %c0_2 = arith.constant 0 : index
    %0 = vector.load %arg1[%c0, %c0_0, %c0_1, %c0_2] : memref<1x16x16x4xbf16, #tpu.memory_space<vmem>>, vector<1x16x16x4xbf16>
    %1 = vector.shape_cast %0 : vector<1x16x16x4xbf16> to vector<16x16x4xbf16>
    %cst = arith.constant 0.000000e+00 : bf16
    %2 = vector.broadcast %cst : bf16 to vector<16x1x4xbf16>
    %3 = tpu.concatenate %2, %1, %2 in 1 : vector<16x1x4xbf16>, vector<16x16x4xbf16>, vector<16x1x4xbf16> -> vector<16x18x4xbf16>
    %cst_3 = arith.constant 0.000000e+00 : bf16
    %4 = vector.broadcast %cst_3 : bf16 to vector<1x18x4xbf16>
    %5 = tpu.concatenate %4, %3, %4 in 0 : vector<1x18x4xbf16>, vector<16x18x4xbf16>, vector<1x18x4xbf16> -> vector<18x18x4xbf16>
    %6 = vector.extract_strided_slice %5 {offsets = [0, 0, 0], sizes = [16, 16, 4], strides = [1, 1, 1]} : vector<18x18x4xbf16> to vector<16x16x4xbf16>
    %7 = vector.shape_cast %6 : vector<16x16x4xbf16> to vector<256x4xbf16>
    %8 = vector.extract_strided_slice %5 {offsets = [0, 1, 0], sizes = [16, 16, 4], strides = [1, 1, 1]} : vector<18x18x4xbf16> to vector<16x16x4xbf16>
    %9 = vector.shape_cast %8 : vector<16x16x4xbf16> to vector<256x4xbf16>
    %10 = vector.extract_strided_slice %5 {offsets = [0, 2, 0], sizes = [16, 16, 4], strides = [1, 1, 1]} : vector<18x18x4xbf16> to vector<16x16x4xbf16>
    %11 = vector.shape_cast %10 : vector<16x16x4xbf16> to vector<256x4xbf16>
    %12 = vector.extract_strided_slice %5 {offsets = [1, 0, 0], sizes = [16, 16, 4], strides = [1, 1, 1]} : vector<18x18x4xbf16> to vector<16x16x4xbf16>
    %13 = vector.shape_cast %12 : vector<16x16x4xbf16> to vector<256x4xbf16>
    %14 = vector.extract_strided_slice %5 {offsets = [1, 1, 0], sizes = [16, 16, 4], strides = [1, 1, 1]} : vector<18x18x4xbf16> to vector<16x16x4xbf16>
    %15 = vector.shape_cast %14 : vector<16x16x4xbf16> to vector<256x4xbf16>
    %16 = vector.extract_strided_slice %5 {offsets = [1, 2, 0], sizes = [16, 16, 4], strides = [1, 1, 1]} : vector<18x18x4xbf16> to vector<16x16x4xbf16>
    %17 = vector.shape_cast %16 : vector<16x16x4xbf16> to vector<256x4xbf16>
    %18 = vector.extract_strided_slice %5 {offsets = [2, 0, 0], sizes = [16, 16, 4], strides = [1, 1, 1]} : vector<18x18x4xbf16> to vector<16x16x4xbf16>
    %19 = vector.shape_cast %18 : vector<16x16x4xbf16> to vector<256x4xbf16>
    %20 = vector.extract_strided_slice %5 {offsets = [2, 1, 0], sizes = [16, 16, 4], strides = [1, 1, 1]} : vector<18x18x4xbf16> to vector<16x16x4xbf16>
    %21 = vector.shape_cast %20 : vector<16x16x4xbf16> to vector<256x4xbf16>
    %22 = vector.extract_strided_slice %5 {offsets = [2, 2, 0], sizes = [16, 16, 4], strides = [1, 1, 1]} : vector<18x18x4xbf16> to vector<16x16x4xbf16>
    %23 = vector.shape_cast %22 : vector<16x16x4xbf16> to vector<256x4xbf16>
    %24 = tpu.concatenate %7, %9, %11, %13, %15, %17, %19, %21, %23 in 1 : vector<256x4xbf16>, vector<256x4xbf16>, vector<256x4xbf16>, vector<256x4xbf16>, vector<256x4xbf16>, vector<256x4xbf16>, vector<256x4xbf16>, vector<256x4xbf16>, vector<256x4xbf16> -> vector<256x36xbf16>
    %c0_4 = arith.constant 0 : index
    %c0_5 = arith.constant 0 : index
    %25 = vector.load %arg2[%c0_4, %c0_5] : memref<36x8xbf16, #tpu.memory_space<vmem>>, vector<36x8xbf16>
    %cst_6 = arith.constant dense<0.000000e+00> : vector<256x8xf32>
    %26 = tpu.matmul %24, %25, %cst_6 {dimension_numbers = #tpu.dot_dimension_numbers<[1], [0], [0], [1], [0, 0, 1, 1], [], []>} : vector<256x36xbf16>, vector<36x8xbf16>, vector<256x8xf32> -> vector<256x8xf32>
    %27 = vector.shape_cast %26 : vector<256x8xf32> to vector<1x16x16x8xf32>
    %28 = arith.truncf %27 : vector<1x16x16x8xf32> to vector<1x16x16x8xbf16>
    %c0_7 = arith.constant 0 : index
    %c0_8 = arith.constant 0 : index
    %c0_9 = arith.constant 0 : index
    %c0_10 = arith.constant 0 : index
    %29 = vector.load %arg3[%c0_7, %c0_8, %c0_9, %c0_10] : memref<1x16x16x8xbf16, #tpu.memory_space<vmem>>, vector<1x16x16x8xbf16>
    tpu.vector_store %arg3[%c0_7, %c0_8, %c0_9, %c0_10], %28 {strides = array<i32>} : memref<1x16x16x8xbf16, #tpu.memory_space<vmem>>, vector<1x16x16x8xbf16>,
    %cst_11 = arith.constant 1.000000e+00 : f32
    %30 = vector.broadcast %cst_11 : f32 to vector<1x256xf32>
    %cst_12 = arith.constant dense<0.000000e+00> : vector<1x8xf32>
    %31 = tpu.matmul %30, %26, %cst_12 {dimension_numbers = #tpu.dot_dimension_numbers<[1], [0], [0], [1], [0, 0, 1, 1], [], []>} : vector<1x256xf32>, vector<256x8xf32>, vector<1x8xf32> -> vector<1x8xf32>
    %cst_13 = arith.constant 3.906250e-03 : f32
    %32 = vector.broadcast %cst_13 : f32 to vector<1x8xf32>
    %33 = arith.mulf %31, %32 : vector<1x8xf32>
    %34 = vector.broadcast %33 : vector<1x8xf32> to vector<256x8xf32>
    %35 = arith.subf %26, %34 : vector<256x8xf32>
    %36 = arith.mulf %35, %35 : vector<256x8xf32>
    %cst_14 = arith.constant dense<0.000000e+00> : vector<1x8xf32>
    %37 = tpu.matmul %30, %36, %cst_14 {dimension_numbers = #tpu.dot_dimension_numbers<[1], [0], [0], [1], [0, 0, 1, 1], [], []>} : vector<1x256xf32>, vector<256x8xf32>, vector<1x8xf32> -> vector<1x8xf32>
    %38 = vector.shape_cast %33 : vector<1x8xf32> to vector<1x1x8xf32>
    %c0_15 = arith.constant 0 : index
    %c0_16 = arith.constant 0 : index
    %c0_17 = arith.constant 0 : index
    %39 = vector.load %arg4[%c0_15, %c0_16, %c0_17] : memref<1x2x8xf32, #tpu.memory_space<vmem>>, vector<1x1x8xf32>
    tpu.vector_store %arg4[%c0_15, %c0_16, %c0_17], %38 {strides = array<i32>} : memref<1x2x8xf32, #tpu.memory_space<vmem>>, vector<1x1x8xf32>,
    %40 = vector.shape_cast %37 : vector<1x8xf32> to vector<1x1x8xf32>
    %c0_18 = arith.constant 0 : index
    %c1 = arith.constant 1 : index
    %c0_19 = arith.constant 0 : index
    %41 = vector.load %arg4[%c0_18, %c1, %c0_19] : memref<1x2x8xf32, #tpu.memory_space<vmem>>, vector<1x1x8xf32>
    tpu.vector_store %arg4[%c0_18, %c1, %c0_19], %40 {strides = array<i32>} : memref<1x2x8xf32, #tpu.memory_space<vmem>>, vector<1x1x8xf32>,
    return
  }
  func.func @transform_0(%arg0: i32) -> (i32, i32, i32, i32) {
    %c0_i32 = arith.constant 0 : i32
    %c0_i32_0 = arith.constant 0 : i32
    %c0_i32_1 = arith.constant 0 : i32
    %c0_i32_2 = arith.constant 0 : i32
    return %arg0, %c0_i32, %c0_i32_0, %c0_i32_1 : i32, i32, i32, i32
  }
  func.func @transform_1(%arg0: i32) -> (i32, i32) {
    %c0_i32 = arith.constant 0 : i32
    %c0_i32_0 = arith.constant 0 : i32
    %c0_i32_1 = arith.constant 0 : i32
    return %c0_i32, %c0_i32_0 : i32, i32
  }
  func.func @transform_2(%arg0: i32) -> (i32, i32, i32, i32) {
    %c0_i32 = arith.constant 0 : i32
    %c0_i32_0 = arith.constant 0 : i32
    %c0_i32_1 = arith.constant 0 : i32
    %c0_i32_2 = arith.constant 0 : i32
    return %arg0, %c0_i32, %c0_i32_0, %c0_i32_1 : i32, i32, i32, i32
  }
  func.func @transform_3(%arg0: i32) -> (i32, i32, i32) {
    %c0_i32 = arith.constant 0 : i32
    %c0_i32_0 = arith.constant 0 : i32
    %c0_i32_1 = arith.constant 0 : i32
    return %arg0, %c0_i32, %c0_i32_0 : i32, i32, i32
  }
}

</mosaic_0001>

<llo_original>
// kernel: tpu_custom_call.1
$region0: #{tpu_custom_call.1}
  #allocation0 [shape = 'u32[]', space=smem, size = 0x4, offset = 0x4, fixed_abs, tag = 'smem constant byte address 0x4 - core index']
  #allocation1 [shape = 'u32[72,128]{1,0:T(1,128)}', space=vmem, size = 0x9000, scoped, tag = 'internal scratch']
  %s0 = inlined_call_operand.vmem [shape: bf16[2,16,16,4], index: 0, kind: input, shape index: {}]
  %s1 = inlined_call_operand.vmem [shape: bf16[36,8], index: 1, kind: input, shape index: {}]
  %s2 = inlined_call_operand.vmem [shape: bf16[2,16,16,8], index: 2, kind: output, shape index: {0}]
  %s3 = inlined_call_operand.hbm [shape: f32[2,2,8], index: 3, kind: output, shape index: {1}]
  %4 = xla_tuple %s2, %s3
  %s5 = sld [smem:[#allocation0]]
  $region49: #{tpu_custom_call.1} parent=0
    _
  %s7 = ssub.s32 1, %s5
  %s8 = scalar_select 0, %s7, %s5
  $region1: #{tpu_custom_call.1} parent=0
    #allocation2 [shape = 'u8[2048]{0}', space=vmem, size = 0x800, scoped, tag = 'output window, operand 1']
    #allocation3 [shape = 's32[2]{0}', space=sflag, size = 0x8, scoped, tag = 'scoped memory for tpu_custom_call.1']
    %9 = vsyncpa [#allocation3], 0
    %s10 = scalar_lea.sflag [#allocation3], 1
    %11 = vsyncpa %s10, 0
    loop: start=0, step=1, limit=4
    $region2: #{tpu_custom_call.1} parent=1 // loop_pre_header
      _
    $region3: #{tpu_custom_call.1} parent=1 // loop_header
      %s13 = sphi 0, %s17
      %p14 = scmp.ge.s32.totalorder %s13, 4
      %s23 = sphi 0, %s25
      %s26 = sphi 0, %s23
      %s27 = sphi 0, %s26
      %s43 = sphi 0, %s27
      %s47 = sphi 0, %s47
      %s49 = sphi 0, %s47
      %s50 = sphi 0, %s49
      %s64 = sphi 0, %s50
      %s70 = sphi 0, %s72
      %s73 = sphi 0, %s70
      %s74 = sphi 0, %s73
      %s90 = sphi 0, %s74
      %s96 = sphi 0, %s98
      %s99 = sphi 0, %s96
      %s100 = sphi 0, %s99
      %s116 = sphi 0, %s100
    $region4: #{tpu_custom_call.1} parent=1 // loop_header_branch
      %16 = sbr.rel (%p14) target = $region8
    $region5: #{tpu_custom_call.1} parent=1 // loop_body
      %s18 = ssub.s32 %s13, 1
      %s19 = ssub.s32 %s13, 2
      %s20 = sadd.s32 %s13, 1
      %s21 = ssub.s32 %s13, %s20
      %p22 = scmp.eq.s32.totalorder %s21, 0
      %s24 = sadd.s32 %s23, 1
      %s25 = scalar_select %p22, %s23, %s24
      %p28 = pneg %p22
      %p29 = scmp.eq.s32.totalorder %s13, 1
      %p30 = por %p28, %p29
      %p31 = scmp.ne.s32.totalorder %s23, %s26
      %p32 = scmp.eq.s32.totalorder %s13, 0
      %p33 = por %p31, %p32
      %p34 = scmp.ne.s32.totalorder %s23, %s26
      %p35 = scmp.eq.s32.totalorder %s18, 1
      %p36 = por %p34, %p35
      %p37 = scmp.ne.s32.totalorder %s26, %s27
      %p38 = scmp.eq.s32.totalorder %s18, 0
      %p39 = por %p37, %p38
      %p40 = scmp.ne.s32.totalorder %s26, %s27
      %p41 = scmp.eq.s32.totalorder %s19, 1
      %p42 = por %p40, %p41
      %p44 = scmp.ne.s32.totalorder %s27, %s43
      %p45 = scmp.eq.s32.totalorder %s19, 0
      %p46 = por %p44, %p45
      %s48 = sadd.s32 %s47, 1
      %p51 = scmp.eq.s32.totalorder %s13, 1
      %p52 = scmp.ne.s32.totalorder %s47, %s49
      %p53 = scmp.eq.s32.totalorder %s13, 0
      %p54 = por %p52, %p53
      %p55 = scmp.ne.s32.totalorder %s47, %s49
      %p56 = scmp.eq.s32.totalorder %s18, 1
      %p57 = por %p55, %p56
      %p58 = scmp.ne.s32.totalorder %s49, %s50
      %p59 = scmp.eq.s32.totalorder %s18, 0
      %p60 = por %p58, %p59
      %p61 = scmp.ne.s32.totalorder %s49, %s50
      %p62 = scmp.eq.s32.totalorder %s19, 1
      %p63 = por %p61, %p62
      %p65 = scmp.ne.s32.totalorder %s50, %s64
      %p66 = scmp.eq.s32.totalorder %s19, 0
      %p67 = por %p65, %p66
      %s68 = ssub.s32 %s13, %s20
      %p69 = scmp.eq.s32.totalorder %s68, 0
      %s71 = sadd.s32 %s70, 1
      %s72 = scalar_select %p69, %s70, %s71
      %p75 = pneg %p69
      %p76 = scmp.eq.s32.totalorder %s13, 1
      %p77 = por %p75, %p76
      %p78 = scmp.ne.s32.totalorder %s70, %s73
      %p79 = scmp.eq.s32.totalorder %s13, 0
      %p80 = por %p78, %p79
      %p81 = scmp.ne.s32.totalorder %s70, %s73
      %p82 = scmp.eq.s32.totalorder %s18, 1
      %p83 = por %p81, %p82
      %p84 = scmp.ne.s32.totalorder %s73, %s74
      %p85 = scmp.eq.s32.totalorder %s18, 0
      %p86 = por %p84, %p85
      %p87 = scmp.ne.s32.totalorder %s73, %s74
      %p88 = scmp.eq.s32.totalorder %s19, 1
      %p89 = por %p87, %p88
      %p91 = scmp.ne.s32.totalorder %s74, %s90
      %p92 = scmp.eq.s32.totalorder %s19, 0
      %p93 = por %p91, %p92
      %s94 = ssub.s32 %s13, %s20
      %p95 = scmp.eq.s32.totalorder %s94, 0
      %s97 = sadd.s32 %s96, 1
      %s98 = scalar_select %p95, %s96, %s97
      %p101 = pneg %p95
      %p102 = scmp.eq.s32.totalorder %s13, 1
      %p103 = por %p101, %p102
      %p104 = scmp.ne.s32.totalorder %s96, %s99
      %p105 = scmp.eq.s32.totalorder %s13, 0
      %p106 = por %p104, %p105
      %p107 = scmp.ne.s32.totalorder %s96, %s99
      %p108 = scmp.eq.s32.totalorder %s18, 1
      %p109 = por %p107, %p108
      %p110 = scmp.ne.s32.totalorder %s99, %s100
      %p111 = scmp.eq.s32.totalorder %s18, 0
      %p112 = por %p110, %p111
      %p113 = scmp.ne.s32.totalorder %s99, %s100
      %p114 = scmp.eq.s32.totalorder %s19, 1
      %p115 = por %p113, %p114
      %p117 = scmp.ne.s32.totalorder %s100, %s116
      %p118 = scmp.eq.s32.totalorder %s19, 0
      %p119 = por %p117, %p118
      %p120 = scmp.le.s32.totalorder 1, %s13
      %p121 = scmp.lt.s32.totalorder %s13, 3
      %p122 = pnand %p120, %p121
      %p123 = pneg %p122
      // Predicated region
      $region9: #{tpu_custom_call.1} parent=5 // pred_check
        _
      $region10: #{tpu_custom_call.1} parent=5 // pred_check_branch
        %125 = sbr.rel (%p122) target = $region12
      $region11: #{tpu_custom_call.1} parent=5 // pred_region
        %s126 = ssub.s32 %s13, 1
        // Predicated region
        $region13: #{tpu_custom_call.1} parent=11 // pred_check
          %p127 = pneg %p60
        $region14: #{tpu_custom_call.1} parent=11 // pred_check_branch
          %129 = sbr.rel (%p127) target = $region16
        $region15: #{tpu_custom_call.1} parent=11 // pred_region
          _
        $region16: #{tpu_custom_call.1} parent=11 // pred_fallthru
          _
      $region12: #{tpu_custom_call.1} parent=5 // pred_fallthru
        _
      %p130 = scmp.lt.s32.totalorder %s13, 2
      // Predicated region
      $region17: #{tpu_custom_call.1} parent=5 // pred_check
        %p131 = pneg %p130
      $region18: #{tpu_custom_call.1} parent=5 // pred_check_branch
        %133 = sbr.rel (%p131) target = $region20
      $region19: #{tpu_custom_call.1} parent=5 // pred_region
        // Predicated region
        $region21: #{tpu_custom_call.1} parent=19 // pred_check
          %p134 = pneg %p33
        $region22: #{tpu_custom_call.1} parent=19 // pred_check_branch
          %136 = sbr.rel (%p134) target = $region24
        $region23: #{tpu_custom_call.1} parent=19 // pred_region
          %p137 = scmp.lt.s32.totalorder %s13, 1
          %s138 = scalar_select %p137, %s13, 1
          %s139 = smul.addr %s138, 32
          %s140 = smul.addr %s139, 4
          %s141 = scalar_lea.vmem %s0, %s140
        $region24: #{tpu_custom_call.1} parent=19 // pred_fallthru
          _
      $region20: #{tpu_custom_call.1} parent=5 // pred_fallthru
        _
      %p142 = scmp.le.s32.totalorder 1, %s13
      %p143 = scmp.lt.s32.totalorder %s13, 3
      %p144 = pnand %p142, %p143
      %p145 = pneg %p144
      // Predicated region
      $region25: #{tpu_custom_call.1} parent=5 // pred_check
        _
      $region26: #{tpu_custom_call.1} parent=5 // pred_check_branch
        %147 = sbr.rel (%p144) target = $region28
      $region27: #{tpu_custom_call.1} parent=5 // pred_region
        %s148 = ssub.s32 %s13, 1
        %p149 = scmp.lt.s32.totalorder %s18, 1
        %s150 = scalar_select %p149, %s18, 1
        %s151 = smul.addr %s150, 32
        %s152 = smul.addr %s151, 4
        %s153 = scalar_lea.vmem %s0, %s152
        %p154 = pneg %p39
        %p155 = pneg %p36
        %p156 = pneg %p60
        %p157 = pneg %p57
        %p158 = pneg %p86
        %p159 = pneg %p83
        %p160 = scmp.lt.s32.totalorder %s18, 1
        %s161 = scalar_select %p160, %s18, 1
        %s162 = smul.addr %s161, 32
        %s163 = smul.addr %s162, 4
        %s164 = scalar_lea.vmem %s2, %s163
        %p165 = pneg %p112
        %p166 = pneg %p109
        %s167 = sand.u32 %s99, 1
        %s168 = scalar_lea.sflag [#allocation3], %s167
        %s169 = sand.u32 %s99, 1
        %s170 = smul.addr %s169, 2
        %s171 = scalar_lea.vmem [#allocation2], %s170
        %p172 = scmp.lt.s32.totalorder %s18, 1
        %s173 = scalar_select %p172, %s18, 1
        %s174 = smul.addr %s173, 32
        %s175 = smul.addr %s174, 4
        %s176 = scalar_lea.vmem %s0, %s175
        %p177 = scmp.lt.s32.totalorder %s18, 1
        %s178 = scalar_select %p177, %s18, 1
        %s179 = smul.addr %s178, 32
        %s180 = smul.addr %s179, 4
        %s181 = scalar_lea.vmem %s2, %s180
        %v183 = vld [vmem:[%s176] sm:$0xf]
        %v184 = vld [vmem:[%s176 + $0x4] sm:$0xf]
        %v185 = vld [vmem:[%s176 + $0x8] sm:$0xf]
        %v186 = vld [vmem:[%s176 + $0xc] sm:$0xf]
        %v187 = vld [vmem:[%s176 + $0x10] sm:$0xf]
        %v188 = vld [vmem:[%s176 + $0x14] sm:$0xf]
        %v189 = vld [vmem:[%s176 + $0x18] sm:$0xf]
        %v190 = vld [vmem:[%s176 + $0x1c] sm:$0xf]
        %v191 = vld [vmem:[%s176 + $0x20] sm:$0xf]
        %v192 = vld [vmem:[%s176 + $0x24] sm:$0xf]
        %v193 = vld [vmem:[%s176 + $0x28] sm:$0xf]
        %v194 = vld [vmem:[%s176 + $0x2c] sm:$0xf]
        %v195 = vld [vmem:[%s176 + $0x30] sm:$0xf]
        %v196 = vld [vmem:[%s176 + $0x34] sm:$0xf]
        %v197 = vld [vmem:[%s176 + $0x38] sm:$0xf]
        %v198 = vld [vmem:[%s176 + $0x3c] sm:$0xf]
        %v199 = vld [vmem:[%s176 + $0x40] sm:$0xf]
        %v200 = vld [vmem:[%s176 + $0x44] sm:$0xf]
        %v201 = vld [vmem:[%s176 + $0x48] sm:$0xf]
        %v202 = vld [vmem:[%s176 + $0x4c] sm:$0xf]
        %v203 = vld [vmem:[%s176 + $0x50] sm:$0xf]
        %v204 = vld [vmem:[%s176 + $0x54] sm:$0xf]
        %v205 = vld [vmem:[%s176 + $0x58] sm:$0xf]
        %v206 = vld [vmem:[%s176 + $0x5c] sm:$0xf]
        %v207 = vld [vmem:[%s176 + $0x60] sm:$0xf]
        %v208 = vld [vmem:[%s176 + $0x64] sm:$0xf]
        %v209 = vld [vmem:[%s176 + $0x68] sm:$0xf]
        %v210 = vld [vmem:[%s176 + $0x6c] sm:$0xf]
        %v211 = vld [vmem:[%s176 + $0x70] sm:$0xf]
        %v212 = vld [vmem:[%s176 + $0x74] sm:$0xf]
        %v213 = vld [vmem:[%s176 + $0x78] sm:$0xf]
        %v214 = vld [vmem:[%s176 + $0x7c] sm:$0xf]
        %v247 = vunpack.c.l.b16 %v183
        %v248 = vunpack.c.l.b16 %v184
        %v249 = vunpack.c.l.b16 %v185
        %v250 = vunpack.c.l.b16 %v186
        %v251 = vunpack.c.l.b16 %v187
        %v252 = vunpack.c.l.b16 %v188
        %v253 = vunpack.c.l.b16 %v189
        %v254 = vunpack.c.l.b16 %v190
        %v255 = vunpack.c.l.b16 %v191
        %v256 = vunpack.c.l.b16 %v192
        %v257 = vunpack.c.l.b16 %v193
        %v258 = vunpack.c.l.b16 %v194
        %v259 = vunpack.c.l.b16 %v195
        %v260 = vunpack.c.l.b16 %v196
        %v261 = vunpack.c.l.b16 %v197
        %v262 = vunpack.c.l.b16 %v198
        %v263 = vunpack.c.l.b16 %v199
        %v264 = vunpack.c.l.b16 %v200
        %v265 = vunpack.c.l.b16 %v201
        %v266 = vunpack.c.l.b16 %v202
        %v267 = vunpack.c.l.b16 %v203
        %v268 = vunpack.c.l.b16 %v204
        %v269 = vunpack.c.l.b16 %v205
        %v270 = vunpack.c.l.b16 %v206
        %v271 = vunpack.c.l.b16 %v207
        %v272 = vunpack.c.l.b16 %v208
        %v273 = vunpack.c.l.b16 %v209
        %v274 = vunpack.c.l.b16 %v210
        %v275 = vunpack.c.l.b16 %v211
        %v276 = vunpack.c.l.b16 %v212
        %v277 = vunpack.c.l.b16 %v213
        %v278 = vunpack.c.l.b16 %v214
        %v279 = vpack.c.b16 %v248, %v247
        %v280 = vpack.c.b16 %v250, %v249
        %v281 = vpack.c.b16 %v252, %v251
        %v282 = vpack.c.b16 %v254, %v253
        %v283 = vpack.c.b16 %v256, %v255
        %v284 = vpack.c.b16 %v258, %v257
        %v285 = vpack.c.b16 %v260, %v259
        %v286 = vpack.c.b16 %v262, %v261
        %v287 = vpack.c.b16 %v264, %v263
        %v288 = vpack.c.b16 %v266, %v265
        %v289 = vpack.c.b16 %v268, %v267
        %v290 = vpack.c.b16 %v270, %v269
        %v291 = vpack.c.b16 %v272, %v271
        %v292 = vpack.c.b16 %v274, %v273
        %v293 = vpack.c.b16 %v276, %v275
        %v294 = vpack.c.b16 %v278, %v277
        %v296 = vshrl.u32 %v279, 16
        %v298 = vrot.slane %v296, 7
        %v299 = vshll.u32 %v279, 16
        %v301 = vor.u32 %v298, %v299
        %v303 = vshrl.u32 %v280, 16
        %v305 = vrot.slane %v303, 7
        %v306 = vshll.u32 %v280, 16
        %v308 = vor.u32 %v305, %v306
        %v310 = vshrl.u32 %v281, 16
        %v312 = vrot.slane %v310, 7
        %v313 = vshll.u32 %v281, 16
        %v315 = vor.u32 %v312, %v313
        %v317 = vshrl.u32 %v282, 16
        %v319 = vrot.slane %v317, 7
        %v320 = vshll.u32 %v282, 16
        %v322 = vor.u32 %v319, %v320
        %v324 = vshrl.u32 %v283, 16
        %v326 = vrot.slane %v324, 7
        %v327 = vshll.u32 %v283, 16
        %v329 = vor.u32 %v326, %v327
        %v331 = vshrl.u32 %v284, 16
        %v333 = vrot.slane %v331, 7
        %v334 = vshll.u32 %v284, 16
        %v336 = vor.u32 %v333, %v334
        %v338 = vshrl.u32 %v285, 16
        %v340 = vrot.slane %v338, 7
        %v341 = vshll.u32 %v285, 16
        %v343 = vor.u32 %v340, %v341
        %v345 = vshrl.u32 %v286, 16
        %v347 = vrot.slane %v345, 7
        %v348 = vshll.u32 %v286, 16
        %v350 = vor.u32 %v347, %v348
        %v352 = vshrl.u32 %v287, 16
        %v354 = vrot.slane %v352, 7
        %v355 = vshll.u32 %v287, 16
        %v357 = vor.u32 %v354, %v355
        %v359 = vshrl.u32 %v288, 16
        %v361 = vrot.slane %v359, 7
        %v362 = vshll.u32 %v288, 16
        %v364 = vor.u32 %v361, %v362
        %v366 = vshrl.u32 %v289, 16
        %v368 = vrot.slane %v366, 7
        %v369 = vshll.u32 %v289, 16
        %v371 = vor.u32 %v368, %v369
        %v373 = vshrl.u32 %v290, 16
        %v375 = vrot.slane %v373, 7
        %v376 = vshll.u32 %v290, 16
        %v378 = vor.u32 %v375, %v376
        %v380 = vshrl.u32 %v291, 16
        %v382 = vrot.slane %v380, 7
        %v383 = vshll.u32 %v291, 16
        %v385 = vor.u32 %v382, %v383
        %v387 = vshrl.u32 %v292, 16
        %v389 = vrot.slane %v387, 7
        %v390 = vshll.u32 %v292, 16
        %v392 = vor.u32 %v389, %v390
        %v394 = vshrl.u32 %v293, 16
        %v396 = vrot.slane %v394, 7
        %v397 = vshll.u32 %v293, 16
        %v399 = vor.u32 %v396, %v397
        %v401 = vshrl.u32 %v294, 16
        %v403 = vrot.slane %v401, 7
        %v404 = vshll.u32 %v294, 16
        %v406 = vor.u32 %v403, %v404
        %vm439 = vcmask 1040384
        %vm440 = vsmask.f32 256
        %vm441 = vmand %vm439, %vm440
        %v442 = vsel %vm441, 0, %v301
        %v443 = vsel %vm441, 0, %v308
        %v444 = vsel %vm441, 0, %v315
        %v445 = vsel %vm441, 0, %v322
        %v446 = vsel %vm441, 0, %v329
        %v447 = vsel %vm441, 0, %v336
        %v448 = vsel %vm441, 0, %v343
        %v449 = vsel %vm441, 0, %v350
        %v450 = vsel %vm441, 0, %v357
        %v451 = vsel %vm441, 0, %v364
        %v452 = vsel %vm441, 0, %v371
        %v453 = vsel %vm441, 0, %v378
        %v454 = vsel %vm441, 0, %v385
        %v455 = vsel %vm441, 0, %v392
        %v456 = vsel %vm441, 0, %v399
        %v457 = vsel %vm441, 0, %v406
        %v458 = vsel %vm441, %v298, 0
        %v459 = vsel %vm441, %v305, 0
        %v460 = vsel %vm441, %v312, 0
        %v461 = vsel %vm441, %v319, 0
        %v462 = vsel %vm441, %v326, 0
        %v463 = vsel %vm441, %v333, 0
        %v464 = vsel %vm441, %v340, 0
        %v465 = vsel %vm441, %v347, 0
        %v466 = vsel %vm441, %v354, 0
        %v467 = vsel %vm441, %v361, 0
        %v468 = vsel %vm441, %v368, 0
        %v469 = vsel %vm441, %v375, 0
        %v470 = vsel %vm441, %v382, 0
        %v471 = vsel %vm441, %v389, 0
        %v472 = vsel %vm441, %v396, 0
        %v473 = vsel %vm441, %v403, 0
        %vm474 = vsmask.f32 7424
        %v476 = vshrl.u32 0, 16
        %v478 = vshll.u32 0, 16
        %v480 = vrot.slane %v478, 1
        %v481 = vor.u32 %v476, %v480
        %v482 = vsel %vm474, %v481, %v480
        %v484 = vshrl.u32 %v442, 16
        %v486 = vshll.u32 %v442, 16
        %v488 = vrot.slane %v486, 1
        %v489 = vor.u32 %v484, %v488
        %v491 = vshll.u32 %v458, 16
        %v493 = vrot.slane %v491, 1
        %v494 = vsel %vm474, %v489, %v493
        %v496 = vshrl.u32 %v443, 16
        %v498 = vshll.u32 %v443, 16
        %v500 = vrot.slane %v498, 1
        %v501 = vor.u32 %v496, %v500
        %v503 = vshll.u32 %v459, 16
        %v505 = vrot.slane %v503, 1
        %v506 = vsel %vm474, %v501, %v505
        %v508 = vshrl.u32 %v444, 16
        %v510 = vshll.u32 %v444, 16
        %v512 = vrot.slane %v510, 1
        %v513 = vor.u32 %v508, %v512
        %v515 = vshll.u32 %v460, 16
        %v517 = vrot.slane %v515, 1
        %v518 = vsel %vm474, %v513, %v517
        %v520 = vshrl.u32 %v445, 16
        %v522 = vshll.u32 %v445, 16
        %v524 = vrot.slane %v522, 1
        %v525 = vor.u32 %v520, %v524
        %v527 = vshll.u32 %v461, 16
        %v529 = vrot.slane %v527, 1
        %v530 = vsel %vm474, %v525, %v529
        %v532 = vshrl.u32 %v446, 16
        %v534 = vshll.u32 %v446, 16
        %v536 = vrot.slane %v534, 1
        %v537 = vor.u32 %v532, %v536
        %v539 = vshll.u32 %v462, 16
        %v541 = vrot.slane %v539, 1
        %v542 = vsel %vm474, %v537, %v541
        %v544 = vshrl.u32 %v447, 16
        %v546 = vshll.u32 %v447, 16
        %v548 = vrot.slane %v546, 1
        %v549 = vor.u32 %v544, %v548
        %v551 = vshll.u32 %v463, 16
        %v553 = vrot.slane %v551, 1
        %v554 = vsel %vm474, %v549, %v553
        %v556 = vshrl.u32 %v448, 16
        %v558 = vshll.u32 %v448, 16
        %v560 = vrot.slane %v558, 1
        %v561 = vor.u32 %v556, %v560
        %v563 = vshll.u32 %v464, 16
        %v565 = vrot.slane %v563, 1
        %v566 = vsel %vm474, %v561, %v565
        %v568 = vshrl.u32 %v449, 16
        %v570 = vshll.u32 %v449, 16
        %v572 = vrot.slane %v570, 1
        %v573 = vor.u32 %v568, %v572
        %v575 = vshll.u32 %v465, 16
        %v577 = vrot.slane %v575, 1
        %v578 = vsel %vm474, %v573, %v577
        %v580 = vshrl.u32 %v450, 16
        %v582 = vshll.u32 %v450, 16
        %v584 = vrot.slane %v582, 1
        %v585 = vor.u32 %v580, %v584
        %v587 = vshll.u32 %v466, 16
        %v589 = vrot.slane %v587, 1
        %v590 = vsel %vm474, %v585, %v589
        %v592 = vshrl.u32 %v451, 16
        %v594 = vshll.u32 %v451, 16
        %v596 = vrot.slane %v594, 1
        %v597 = vor.u32 %v592, %v596
        %v599 = vshll.u32 %v467, 16
        %v601 = vrot.slane %v599, 1
        %v602 = vsel %vm474, %v597, %v601
        %v604 = vshrl.u32 %v452, 16
        %v606 = vshll.u32 %v452, 16
        %v608 = vrot.slane %v606, 1
        %v609 = vor.u32 %v604, %v608
        %v611 = vshll.u32 %v468, 16
        %v613 = vrot.slane %v611, 1
        %v614 = vsel %vm474, %v609, %v613
        %v616 = vshrl.u32 %v453, 16
        %v618 = vshll.u32 %v453, 16
        %v620 = vrot.slane %v618, 1
        %v621 = vor.u32 %v616, %v620
        %v623 = vshll.u32 %v469, 16
        %v625 = vrot.slane %v623, 1
        %v626 = vsel %vm474, %v621, %v625
        %v628 = vshrl.u32 %v454, 16
        %v630 = vshll.u32 %v454, 16
        %v632 = vrot.slane %v630, 1
        %v633 = vor.u32 %v628, %v632
        %v635 = vshll.u32 %v470, 16
        %v637 = vrot.slane %v635, 1
        %v638 = vsel %vm474, %v633, %v637
        %v640 = vshrl.u32 %v455, 16
        %v642 = vshll.u32 %v455, 16
        %v644 = vrot.slane %v642, 1
        %v645 = vor.u32 %v640, %v644
        %v647 = vshll.u32 %v471, 16
        %v649 = vrot.slane %v647, 1
        %v650 = vsel %vm474, %v645, %v649
        %v652 = vshrl.u32 %v456, 16
        %v654 = vshll.u32 %v456, 16
        %v656 = vrot.slane %v654, 1
        %v657 = vor.u32 %v652, %v656
        %v659 = vshll.u32 %v472, 16
        %v661 = vrot.slane %v659, 1
        %v662 = vsel %vm474, %v657, %v661
        %vm694 = vcmask 1046528
        %v695 = vrot.slane 0, 1
        %v696 = vsel %vm694, %v695, %v695
        %v697 = vrot.slane %v442, 1
        %v698 = vrot.slane %v458, 1
        %v699 = vsel %vm694, %v697, %v698
        %v700 = vrot.slane %v443, 1
        %v701 = vrot.slane %v459, 1
        %v702 = vsel %vm694, %v700, %v701
        %v703 = vrot.slane %v444, 1
        %v704 = vrot.slane %v460, 1
        %v705 = vsel %vm694, %v703, %v704
        %v706 = vrot.slane %v445, 1
        %v707 = vrot.slane %v461, 1
        %v708 = vsel %vm694, %v706, %v707
        %v709 = vrot.slane %v446, 1
        %v710 = vrot.slane %v462, 1
        %v711 = vsel %vm694, %v709, %v710
        %v712 = vrot.slane %v447, 1
        %v713 = vrot.slane %v463, 1
        %v714 = vsel %vm694, %v712, %v713
        %v715 = vrot.slane %v448, 1
        %v716 = vrot.slane %v464, 1
        %v717 = vsel %vm694, %v715, %v716
        %v718 = vrot.slane %v449, 1
        %v719 = vrot.slane %v465, 1
        %v720 = vsel %vm694, %v718, %v719
        %v721 = vrot.slane %v450, 1
        %v722 = vrot.slane %v466, 1
        %v723 = vsel %vm694, %v721, %v722
        %v724 = vrot.slane %v451, 1
        %v725 = vrot.slane %v467, 1
        %v726 = vsel %vm694, %v724, %v725
        %v727 = vrot.slane %v452, 1
        %v728 = vrot.slane %v468, 1
        %v729 = vsel %vm694, %v727, %v728
        %v730 = vrot.slane %v453, 1
        %v731 = vrot.slane %v469, 1
        %v732 = vsel %vm694, %v730, %v731
        %v733 = vrot.slane %v454, 1
        %v734 = vrot.slane %v470, 1
        %v735 = vsel %vm694, %v733, %v734
        %v736 = vrot.slane %v455, 1
        %v737 = vrot.slane %v471, 1
        %v738 = vsel %vm694, %v736, %v737
        %v739 = vrot.slane %v456, 1
        %v740 = vrot.slane %v472, 1
        %v741 = vsel %vm694, %v739, %v740
        %v743 = vshrl.u32 %v457, 16
        %v745 = vshll.u32 %v457, 16
        %v747 = vrot.slane %v745, 1
        %v748 = vor.u32 %v743, %v747
        %v750 = vshll.u32 %v473, 16
        %v752 = vrot.slane %v750, 1
        %v753 = vsel %vm474, %v748, %v752
        %v756 = vrot.slane %v457, 1
        %v757 = vrot.slane %v473, 1
        %v758 = vsel %vm694, %v756, %v757
        %759 = vrot.lane.b32.xlu0 %v482, 4
        %v760 = vpop.permute.xlu0 %759
        %761 = vrot.lane.b32.xlu0 %v494, 4
        %v762 = vpop.permute.xlu0 %761
        %763 = vrot.lane.b32.xlu0 %v506, 4
        %v764 = vpop.permute.xlu0 %763
        %765 = vrot.lane.b32.xlu0 %v518, 4
        %v766 = vpop.permute.xlu0 %765
        %767 = vrot.lane.b32.xlu0 %v530, 4
        %v768 = vpop.permute.xlu0 %767
        %769 = vrot.lane.b32.xlu0 %v542, 4
        %v770 = vpop.permute.xlu0 %769
        %771 = vrot.lane.b32.xlu0 %v554, 4
        %v772 = vpop.permute.xlu0 %771
        %773 = vrot.lane.b32.xlu0 %v566, 4
        %v774 = vpop.permute.xlu0 %773
        %775 = vrot.lane.b32.xlu0 %v578, 4
        %v776 = vpop.permute.xlu0 %775
        %777 = vrot.lane.b32.xlu0 %v590, 4
        %v778 = vpop.permute.xlu0 %777
        %779 = vrot.lane.b32.xlu0 %v602, 4
        %v780 = vpop.permute.xlu0 %779
        %781 = vrot.lane.b32.xlu0 %v614, 4
        %v782 = vpop.permute.xlu0 %781
        %783 = vrot.lane.b32.xlu0 %v626, 4
        %v784 = vpop.permute.xlu0 %783
        %785 = vrot.lane.b32.xlu0 %v638, 4
        %v786 = vpop.permute.xlu0 %785
        %787 = vrot.lane.b32.xlu0 %v650, 4
        %v788 = vpop.permute.xlu0 %787
        %789 = vrot.lane.b32.xlu0 %v662, 4
        %v790 = vpop.permute.xlu0 %789
        %791 = vrot.lane.b32.xlu0 %v696, 8
        %v792 = vpop.permute.xlu0 %791
        %793 = vrot.lane.b32.xlu0 %v699, 8
        %v794 = vpop.permute.xlu0 %793
        %795 = vrot.lane.b32.xlu0 %v702, 8
        %v796 = vpop.permute.xlu0 %795
        %797 = vrot.lane.b32.xlu0 %v705, 8
        %v798 = vpop.permute.xlu0 %797
        %799 = vrot.lane.b32.xlu0 %v708, 8
        %v800 = vpop.permute.xlu0 %799
        %801 = vrot.lane.b32.xlu0 %v711, 8
        %v802 = vpop.permute.xlu0 %801
        %803 = vrot.lane.b32.xlu0 %v714, 8
        %v804 = vpop.permute.xlu0 %803
        %805 = vrot.lane.b32.xlu0 %v717, 8
        %v806 = vpop.permute.xlu0 %805
        %807 = vrot.lane.b32.xlu0 %v720, 8
        %v808 = vpop.permute.xlu0 %807
        %809 = vrot.lane.b32.xlu0 %v723, 8
        %v810 = vpop.permute.xlu0 %809
        %811 = vrot.lane.b32.xlu0 %v726, 8
        %v812 = vpop.permute.xlu0 %811
        %813 = vrot.lane.b32.xlu0 %v729, 8
        %v814 = vpop.permute.xlu0 %813
        %815 = vrot.lane.b32.xlu0 %v732, 8
        %v816 = vpop.permute.xlu0 %815
        %817 = vrot.lane.b32.xlu0 %v735, 8
        %v818 = vpop.permute.xlu0 %817
        %819 = vrot.lane.b32.xlu0 %v738, 8
        %v820 = vpop.permute.xlu0 %819
        %821 = vrot.lane.b32.xlu0 %v741, 8
        %v822 = vpop.permute.xlu0 %821
        %823 = vrot.lane.b32.xlu0 %v442, 12
        %v824 = vpop.permute.xlu0 %823
        %825 = vrot.lane.b32.xlu0 %v443, 12
        %v826 = vpop.permute.xlu0 %825
        %827 = vrot.lane.b32.xlu0 %v444, 12
        %v828 = vpop.permute.xlu0 %827
        %829 = vrot.lane.b32.xlu0 %v445, 12
        %v830 = vpop.permute.xlu0 %829
        %831 = vrot.lane.b32.xlu0 %v446, 12
        %v832 = vpop.permute.xlu0 %831
        %833 = vrot.lane.b32.xlu0 %v447, 12
        %v834 = vpop.permute.xlu0 %833
        %835 = vrot.lane.b32.xlu0 %v448, 12
        %v836 = vpop.permute.xlu0 %835
        %837 = vrot.lane.b32.xlu0 %v449, 12
        %v838 = vpop.permute.xlu0 %837
        %839 = vrot.lane.b32.xlu0 %v450, 12
        %v840 = vpop.permute.xlu0 %839
        %841 = vrot.lane.b32.xlu0 %v451, 12
        %v842 = vpop.permute.xlu0 %841
        %843 = vrot.lane.b32.xlu0 %v452, 12
        %v844 = vpop.permute.xlu0 %843
        %845 = vrot.lane.b32.xlu0 %v453, 12
        %v846 = vpop.permute.xlu0 %845
        %847 = vrot.lane.b32.xlu0 %v454, 12
        %v848 = vpop.permute.xlu0 %847
        %849 = vrot.lane.b32.xlu0 %v455, 12
        %v850 = vpop.permute.xlu0 %849
        %851 = vrot.lane.b32.xlu0 %v456, 12
        %v852 = vpop.permute.xlu0 %851
        %853 = vrot.lane.b32.xlu0 %v457, 12
        %v854 = vpop.permute.xlu0 %853
        %855 = vrot.lane.b32.xlu0 %v494, 16
        %v856 = vpop.permute.xlu0 %855
        %857 = vrot.lane.b32.xlu0 %v506, 16
        %v858 = vpop.permute.xlu0 %857
        %859 = vrot.lane.b32.xlu0 %v518, 16
        %v860 = vpop.permute.xlu0 %859
        %861 = vrot.lane.b32.xlu0 %v530, 16
        %v862 = vpop.permute.xlu0 %861
        %863 = vrot.lane.b32.xlu0 %v542, 16
        %v864 = vpop.permute.xlu0 %863
        %865 = vrot.lane.b32.xlu0 %v554, 16
        %v866 = vpop.permute.xlu0 %865
        %867 = vrot.lane.b32.xlu0 %v566, 16
        %v868 = vpop.permute.xlu0 %867
        %869 = vrot.lane.b32.xlu0 %v578, 16
        %v870 = vpop.permute.xlu0 %869
        %871 = vrot.lane.b32.xlu0 %v590, 16
        %v872 = vpop.permute.xlu0 %871
        %873 = vrot.lane.b32.xlu0 %v602, 16
        %v874 = vpop.permute.xlu0 %873
        %875 = vrot.lane.b32.xlu0 %v614, 16
        %v876 = vpop.permute.xlu0 %875
        %877 = vrot.lane.b32.xlu0 %v626, 16
        %v878 = vpop.permute.xlu0 %877
        %879 = vrot.lane.b32.xlu0 %v638, 16
        %v880 = vpop.permute.xlu0 %879
        %881 = vrot.lane.b32.xlu0 %v650, 16
        %v882 = vpop.permute.xlu0 %881
        %883 = vrot.lane.b32.xlu0 %v662, 16
        %v884 = vpop.permute.xlu0 %883
        %885 = vrot.lane.b32.xlu0 %v753, 16
        %v886 = vpop.permute.xlu0 %885
        %887 = vrot.lane.b32.xlu0 %v699, 20
        %v888 = vpop.permute.xlu0 %887
        %889 = vrot.lane.b32.xlu0 %v702, 20
        %v890 = vpop.permute.xlu0 %889
        %891 = vrot.lane.b32.xlu0 %v705, 20
        %v892 = vpop.permute.xlu0 %891
        %893 = vrot.lane.b32.xlu0 %v708, 20
        %v894 = vpop.permute.xlu0 %893
        %895 = vrot.lane.b32.xlu0 %v711, 20
        %v896 = vpop.permute.xlu0 %895
        %897 = vrot.lane.b32.xlu0 %v714, 20
        %v898 = vpop.permute.xlu0 %897
        %899 = vrot.lane.b32.xlu0 %v717, 20
        %v900 = vpop.permute.xlu0 %899
        %901 = vrot.lane.b32.xlu0 %v720, 20
        %v902 = vpop.permute.xlu0 %901
        %903 = vrot.lane.b32.xlu0 %v723, 20
        %v904 = vpop.permute.xlu0 %903
        %905 = vrot.lane.b32.xlu0 %v726, 20
        %v906 = vpop.permute.xlu0 %905
        %907 = vrot.lane.b32.xlu0 %v729, 20
        %v908 = vpop.permute.xlu0 %907
        %909 = vrot.lane.b32.xlu0 %v732, 20
        %v910 = vpop.permute.xlu0 %909
        %911 = vrot.lane.b32.xlu0 %v735, 20
        %v912 = vpop.permute.xlu0 %911
        %913 = vrot.lane.b32.xlu0 %v738, 20
        %v914 = vpop.permute.xlu0 %913
        %915 = vrot.lane.b32.xlu0 %v741, 20
        %v916 = vpop.permute.xlu0 %915
        %917 = vrot.lane.b32.xlu0 %v758, 20
        %v918 = vpop.permute.xlu0 %917
        %919 = vrot.lane.b32.xlu0 %v443, 24
        %v920 = vpop.permute.xlu0 %919
        %921 = vrot.lane.b32.xlu0 %v444, 24
        %v922 = vpop.permute.xlu0 %921
        %923 = vrot.lane.b32.xlu0 %v445, 24
        %v924 = vpop.permute.xlu0 %923
        %925 = vrot.lane.b32.xlu0 %v446, 24
        %v926 = vpop.permute.xlu0 %925
        %927 = vrot.lane.b32.xlu0 %v447, 24
        %v928 = vpop.permute.xlu0 %927
        %929 = vrot.lane.b32.xlu0 %v448, 24
        %v930 = vpop.permute.xlu0 %929
        %931 = vrot.lane.b32.xlu0 %v449, 24
        %v932 = vpop.permute.xlu0 %931
        %933 = vrot.lane.b32.xlu0 %v450, 24
        %v934 = vpop.permute.xlu0 %933
        %935 = vrot.lane.b32.xlu0 %v451, 24
        %v936 = vpop.permute.xlu0 %935
        %937 = vrot.lane.b32.xlu0 %v452, 24
        %v938 = vpop.permute.xlu0 %937
        %939 = vrot.lane.b32.xlu0 %v453, 24
        %v940 = vpop.permute.xlu0 %939
        %941 = vrot.lane.b32.xlu0 %v454, 24
        %v942 = vpop.permute.xlu0 %941
        %943 = vrot.lane.b32.xlu0 %v455, 24
        %v944 = vpop.permute.xlu0 %943
        %945 = vrot.lane.b32.xlu0 %v456, 24
        %v946 = vpop.permute.xlu0 %945
        %947 = vrot.lane.b32.xlu0 %v457, 24
        %v948 = vpop.permute.xlu0 %947
        %949 = vrot.lane.b32.xlu0 0, 24
        %v950 = vpop.permute.xlu0 %949
        %951 = vrot.lane.b32.xlu0 %v506, 28
        %v952 = vpop.permute.xlu0 %951
        %953 = vrot.lane.b32.xlu0 %v518, 28
        %v954 = vpop.permute.xlu0 %953
        %955 = vrot.lane.b32.xlu0 %v530, 28
        %v956 = vpop.permute.xlu0 %955
        %957 = vrot.lane.b32.xlu0 %v542, 28
        %v958 = vpop.permute.xlu0 %957
        %959 = vrot.lane.b32.xlu0 %v554, 28
        %v960 = vpop.permute.xlu0 %959
        %961 = vrot.lane.b32.xlu0 %v566, 28
        %v962 = vpop.permute.xlu0 %961
        %963 = vrot.lane.b32.xlu0 %v578, 28
        %v964 = vpop.permute.xlu0 %963
        %965 = vrot.lane.b32.xlu0 %v590, 28
        %v966 = vpop.permute.xlu0 %965
        %967 = vrot.lane.b32.xlu0 %v602, 28
        %v968 = vpop.permute.xlu0 %967
        %969 = vrot.lane.b32.xlu0 %v614, 28
        %v970 = vpop.permute.xlu0 %969
        %971 = vrot.lane.b32.xlu0 %v626, 28
        %v972 = vpop.permute.xlu0 %971
        %973 = vrot.lane.b32.xlu0 %v638, 28
        %v974 = vpop.permute.xlu0 %973
        %975 = vrot.lane.b32.xlu0 %v650, 28
        %v976 = vpop.permute.xlu0 %975
        %977 = vrot.lane.b32.xlu0 %v662, 28
        %v978 = vpop.permute.xlu0 %977
        %979 = vrot.lane.b32.xlu0 %v753, 28
        %v980 = vpop.permute.xlu0 %979
        %981 = vrot.lane.b32.xlu0 %v482, 28
        %v982 = vpop.permute.xlu0 %981
        %983 = vrot.lane.b32.xlu0 %v702, 32
        %v984 = vpop.permute.xlu0 %983
        %985 = vrot.lane.b32.xlu0 %v705, 32
        %v986 = vpop.permute.xlu0 %985
        %987 = vrot.lane.b32.xlu0 %v708, 32
        %v988 = vpop.permute.xlu0 %987
        %989 = vrot.lane.b32.xlu0 %v711, 32
        %v990 = vpop.permute.xlu0 %989
        %991 = vrot.lane.b32.xlu0 %v714, 32
        %v992 = vpop.permute.xlu0 %991
        %993 = vrot.lane.b32.xlu0 %v717, 32
        %v994 = vpop.permute.xlu0 %993
        %995 = vrot.lane.b32.xlu0 %v720, 32
        %v996 = vpop.permute.xlu0 %995
        %997 = vrot.lane.b32.xlu0 %v723, 32
        %v998 = vpop.permute.xlu0 %997
        %999 = vrot.lane.b32.xlu0 %v726, 32
        %v1000 = vpop.permute.xlu0 %999
        %1001 = vrot.lane.b32.xlu0 %v729, 32
        %v1002 = vpop.permute.xlu0 %1001
        %1003 = vrot.lane.b32.xlu0 %v732, 32
        %v1004 = vpop.permute.xlu0 %1003
        %1005 = vrot.lane.b32.xlu0 %v735, 32
        %v1006 = vpop.permute.xlu0 %1005
        %1007 = vrot.lane.b32.xlu0 %v738, 32
        %v1008 = vpop.permute.xlu0 %1007
        %1009 = vrot.lane.b32.xlu0 %v741, 32
        %v1010 = vpop.permute.xlu0 %1009
        %1011 = vrot.lane.b32.xlu0 %v758, 32
        %v1012 = vpop.permute.xlu0 %1011
        %1013 = vrot.lane.b32.xlu0 %v696, 32
        %v1014 = vpop.permute.xlu0 %1013
        %vm1015 = vcmask 31744
        %v1017 = vsel %vm1015, 0, %v760
        %v1019 = vsel %vm1015, %v442, %v762
        %v1021 = vsel %vm1015, %v443, %v764
        %v1023 = vsel %vm1015, %v444, %v766
        %v1025 = vsel %vm1015, %v445, %v768
        %v1027 = vsel %vm1015, %v446, %v770
        %v1029 = vsel %vm1015, %v447, %v772
        %v1031 = vsel %vm1015, %v448, %v774
        %v1033 = vsel %vm1015, %v449, %v776
        %v1035 = vsel %vm1015, %v450, %v778
        %v1037 = vsel %vm1015, %v451, %v780
        %v1039 = vsel %vm1015, %v452, %v782
        %v1041 = vsel %vm1015, %v453, %v784
        %v1043 = vsel %vm1015, %v454, %v786
        %v1045 = vsel %vm1015, %v455, %v788
        %v1047 = vsel %vm1015, %v456, %v790
        %vm1048 = vcmask 64512
        %v1050 = vsel %vm1048, %v1017, %v792
        %v1052 = vsel %vm1048, %v1019, %v794
        %v1054 = vsel %vm1048, %v1021, %v796
        %v1056 = vsel %vm1048, %v1023, %v798
        %v1058 = vsel %vm1048, %v1025, %v800
        %v1060 = vsel %vm1048, %v1027, %v802
        %v1062 = vsel %vm1048, %v1029, %v804
        %v1064 = vsel %vm1048, %v1031, %v806
        %v1066 = vsel %vm1048, %v1033, %v808
        %v1068 = vsel %vm1048, %v1035, %v810
        %v1070 = vsel %vm1048, %v1037, %v812
        %v1072 = vsel %vm1048, %v1039, %v814
        %v1074 = vsel %vm1048, %v1041, %v816
        %v1076 = vsel %vm1048, %v1043, %v818
        %v1078 = vsel %vm1048, %v1045, %v820
        %v1080 = vsel %vm1048, %v1047, %v822
        %vm1081 = vcmask 97280
        %v1083 = vsel %vm1081, %v1050, %v824
        %v1085 = vsel %vm1081, %v1052, %v826
        %v1087 = vsel %vm1081, %v1054, %v828
        %v1089 = vsel %vm1081, %v1056, %v830
        %v1091 = vsel %vm1081, %v1058, %v832
        %v1093 = vsel %vm1081, %v1060, %v834
        %v1095 = vsel %vm1081, %v1062, %v836
        %v1097 = vsel %vm1081, %v1064, %v838
        %v1099 = vsel %vm1081, %v1066, %v840
        %v1101 = vsel %vm1081, %v1068, %v842
        %v1103 = vsel %vm1081, %v1070, %v844
        %v1105 = vsel %vm1081, %v1072, %v846
        %v1107 = vsel %vm1081, %v1074, %v848
        %v1109 = vsel %vm1081, %v1076, %v850
        %v1111 = vsel %vm1081, %v1078, %v852
        %v1113 = vsel %vm1081, %v1080, %v854
        %vm1114 = vcmask 130048
        %v1116 = vsel %vm1114, %v1083, %v856
        %v1118 = vsel %vm1114, %v1085, %v858
        %v1120 = vsel %vm1114, %v1087, %v860
        %v1122 = vsel %vm1114, %v1089, %v862
        %v1124 = vsel %vm1114, %v1091, %v864
        %v1126 = vsel %vm1114, %v1093, %v866
        %v1128 = vsel %vm1114, %v1095, %v868
        %v1130 = vsel %vm1114, %v1097, %v870
        %v1132 = vsel %vm1114, %v1099, %v872
        %v1134 = vsel %vm1114, %v1101, %v874
        %v1136 = vsel %vm1114, %v1103, %v876
        %v1138 = vsel %vm1114, %v1105, %v878
        %v1140 = vsel %vm1114, %v1107, %v880
        %v1142 = vsel %vm1114, %v1109, %v882
        %v1144 = vsel %vm1114, %v1111, %v884
        %v1146 = vsel %vm1114, %v1113, %v886
        %vm1147 = vcmask 162816
        %v1149 = vsel %vm1147, %v1116, %v888
        %v1151 = vsel %vm1147, %v1118, %v890
        %v1153 = vsel %vm1147, %v1120, %v892
        %v1155 = vsel %vm1147, %v1122, %v894
        %v1157 = vsel %vm1147, %v1124, %v896
        %v1159 = vsel %vm1147, %v1126, %v898
        %v1161 = vsel %vm1147, %v1128, %v900
        %v1163 = vsel %vm1147, %v1130, %v902
        %v1165 = vsel %vm1147, %v1132, %v904
        %v1167 = vsel %vm1147, %v1134, %v906
        %v1169 = vsel %vm1147, %v1136, %v908
        %v1171 = vsel %vm1147, %v1138, %v910
        %v1173 = vsel %vm1147, %v1140, %v912
        %v1175 = vsel %vm1147, %v1142, %v914
        %v1177 = vsel %vm1147, %v1144, %v916
        %v1179 = vsel %vm1147, %v1146, %v918
        %vm1180 = vcmask 195584
        %v1182 = vsel %vm1180, %v1149, %v920
        %v1184 = vsel %vm1180, %v1151, %v922
        %v1186 = vsel %vm1180, %v1153, %v924
        %v1188 = vsel %vm1180, %v1155, %v926
        %v1190 = vsel %vm1180, %v1157, %v928
        %v1192 = vsel %vm1180, %v1159, %v930
        %v1194 = vsel %vm1180, %v1161, %v932
        %v1196 = vsel %vm1180, %v1163, %v934
        %v1198 = vsel %vm1180, %v1165, %v936
        %v1200 = vsel %vm1180, %v1167, %v938
        %v1202 = vsel %vm1180, %v1169, %v940
        %v1204 = vsel %vm1180, %v1171, %v942
        %v1206 = vsel %vm1180, %v1173, %v944
        %v1208 = vsel %vm1180, %v1175, %v946
        %v1210 = vsel %vm1180, %v1177, %v948
        %v1212 = vsel %vm1180, %v1179, %v950
        %vm1213 = vcmask 228352
        %v1215 = vsel %vm1213, %v1182, %v952
        %v1217 = vsel %vm1213, %v1184, %v954
        %v1219 = vsel %vm1213, %v1186, %v956
        %v1221 = vsel %vm1213, %v1188, %v958
        %v1223 = vsel %vm1213, %v1190, %v960
        %v1225 = vsel %vm1213, %v1192, %v962
        %v1227 = vsel %vm1213, %v1194, %v964
        %v1229 = vsel %vm1213, %v1196, %v966
        %v1231 = vsel %vm1213, %v1198, %v968
        %v1233 = vsel %vm1213, %v1200, %v970
        %v1235 = vsel %vm1213, %v1202, %v972
        %v1237 = vsel %vm1213, %v1204, %v974
        %v1239 = vsel %vm1213, %v1206, %v976
        %v1241 = vsel %vm1213, %v1208, %v978
        %v1243 = vsel %vm1213, %v1210, %v980
        %v1245 = vsel %vm1213, %v1212, %v982
        %vm1246 = vcmask 261120
        %v1248 = vsel %vm1246, %v1215, %v984
        %v1250 = vsel %vm1246, %v1217, %v986
        %v1252 = vsel %vm1246, %v1219, %v988
        %v1254 = vsel %vm1246, %v1221, %v990
        %v1256 = vsel %vm1246, %v1223, %v992
        %v1258 = vsel %vm1246, %v1225, %v994
        %v1260 = vsel %vm1246, %v1227, %v996
        %v1262 = vsel %vm1246, %v1229, %v998
        %v1264 = vsel %vm1246, %v1231, %v1000
        %v1266 = vsel %vm1246, %v1233, %v1002
        %v1268 = vsel %vm1246, %v1235, %v1004
        %v1270 = vsel %vm1246, %v1237, %v1006
        %v1272 = vsel %vm1246, %v1239, %v1008
        %v1274 = vsel %vm1246, %v1241, %v1010
        %v1276 = vsel %vm1246, %v1243, %v1012
        %v1278 = vsel %vm1246, %v1245, %v1014
        %v1279 = vld [vmem:[%s1] sm:$0xf]
        %v1280 = vld [vmem:[%s1 + $0x4] sm:$0xf]
        %v1281 = vld [vmem:[%s1 + $0x8] sm:$0xf]
        %v1282 = vld [vmem:[%s1 + $0xc] sm:$0xf]
        %v1283 = vld [vmem:[%s1 + $0x10] sm:$0x3]
        %v1289 = vunpack.c.l.b16 %v1279
        %v1290 = vunpack.c.l.b16 %v1280
        %v1291 = vunpack.c.l.b16 %v1281
        %v1292 = vunpack.c.l.b16 %v1282
        %v1293 = vunpack.c.l.b16 %v1283
        %v1294 = vpack.c.b16 %v1290, %v1289
        %v1295 = vpack.c.b16 %v1292, %v1291
        %v1296 = vpack.c.b16 %v1293, %v1293
        %vm1299 = vcmask 293888
        %v1300 = vsel %vm1299, %v1248, 0
        %v1302 = vsel %vm1299, %v1250, 0
        %v1304 = vsel %vm1299, %v1252, 0
        %v1306 = vsel %vm1299, %v1254, 0
        %v1308 = vsel %vm1299, %v1256, 0
        %v1310 = vsel %vm1299, %v1258, 0
        %v1312 = vsel %vm1299, %v1260, 0
        %v1314 = vsel %vm1299, %v1262, 0
        %v1316 = vsel %vm1299, %v1264, 0
        %v1318 = vsel %vm1299, %v1266, 0
        %v1320 = vsel %vm1299, %v1268, 0
        %v1322 = vsel %vm1299, %v1270, 0
        %v1324 = vsel %vm1299, %v1272, 0
        %v1326 = vsel %vm1299, %v1274, 0
        %v1328 = vsel %vm1299, %v1276, 0
        %v1330 = vsel %vm1299, %v1278, 0
        %vm1332 = vcmask 1041408
        %v1334 = vsel %vm1332, %v1296, 0
        %1336 = vmatpush.bf16.msra.mxu0 0
        %1337 = vmatpush.bf16.msra.mxu0 0
        %1338 = vmatpush.bf16.msra.mxu0 0
        %1339 = vmatpush.bf16.msra.mxu0 0
        %1340 = vmatpush.bf16.msra.mxu0 0
        %1341 = vmatpush.bf16.msra.mxu0 %v1334
        %1342 = vmatpush.bf16.msra.mxu0 %v1295
        %1343 = vmatpush.bf16.msra.mxu0 %v1294
        %1344 = vmatmul.bf16.gmra.mxu0 %v1300
        %v1345 = vpop.f32.mrf.mxu0
        %v1346 = vadd.f32 0.0, %v1345
        %v1347 = vpop.f32.mrf.mxu0
        %v1348 = vadd.f32 0.0, %v1347
        %1349 = vmatmul.bf16.gmra.mxu0 %v1302
        %v1350 = vpop.f32.mrf.mxu0
        %v1351 = vadd.f32 0.0, %v1350
        %v1352 = vpop.f32.mrf.mxu0
        %v1353 = vadd.f32 0.0, %v1352
        %1354 = vmatmul.bf16.gmra.mxu0 %v1304
        %v1355 = vpop.f32.mrf.mxu0
        %v1356 = vadd.f32 0.0, %v1355
        %v1357 = vpop.f32.mrf.mxu0
        %v1358 = vadd.f32 0.0, %v1357
        %1359 = vmatmul.bf16.gmra.mxu0 %v1306
        %v1360 = vpop.f32.mrf.mxu0
        %v1361 = vadd.f32 0.0, %v1360
        %v1362 = vpop.f32.mrf.mxu0
        %v1363 = vadd.f32 0.0, %v1362
        %1364 = vmatmul.bf16.gmra.mxu0 %v1308
        %v1365 = vpop.f32.mrf.mxu0
        %v1366 = vadd.f32 0.0, %v1365
        %v1367 = vpop.f32.mrf.mxu0
        %v1368 = vadd.f32 0.0, %v1367
        %1369 = vmatmul.bf16.gmra.mxu0 %v1310
        %v1370 = vpop.f32.mrf.mxu0
        %v1371 = vadd.f32 0.0, %v1370
        %v1372 = vpop.f32.mrf.mxu0
        %v1373 = vadd.f32 0.0, %v1372
        %1374 = vmatmul.bf16.gmra.mxu0 %v1312
        %v1375 = vpop.f32.mrf.mxu0
        %v1376 = vadd.f32 0.0, %v1375
        %v1377 = vpop.f32.mrf.mxu0
        %v1378 = vadd.f32 0.0, %v1377
        %1379 = vmatmul.bf16.gmra.mxu0 %v1314
        %v1380 = vpop.f32.mrf.mxu0
        %v1381 = vadd.f32 0.0, %v1380
        %v1382 = vpop.f32.mrf.mxu0
        %v1383 = vadd.f32 0.0, %v1382
        %1384 = vmatmul.bf16.gmra.mxu0 %v1316
        %v1385 = vpop.f32.mrf.mxu0
        %v1386 = vadd.f32 0.0, %v1385
        %v1387 = vpop.f32.mrf.mxu0
        %v1388 = vadd.f32 0.0, %v1387
        %1389 = vmatmul.bf16.gmra.mxu0 %v1318
        %v1390 = vpop.f32.mrf.mxu0
        %v1391 = vadd.f32 0.0, %v1390
        %v1392 = vpop.f32.mrf.mxu0
        %v1393 = vadd.f32 0.0, %v1392
        %1394 = vmatmul.bf16.gmra.mxu0 %v1320
        %v1395 = vpop.f32.mrf.mxu0
        %v1396 = vadd.f32 0.0, %v1395
        %v1397 = vpop.f32.mrf.mxu0
        %v1398 = vadd.f32 0.0, %v1397
        %1399 = vmatmul.bf16.gmra.mxu0 %v1322
        %v1400 = vpop.f32.mrf.mxu0
        %v1401 = vadd.f32 0.0, %v1400
        %v1402 = vpop.f32.mrf.mxu0
        %v1403 = vadd.f32 0.0, %v1402
        %1404 = vmatmul.bf16.gmra.mxu0 %v1324
        %v1405 = vpop.f32.mrf.mxu0
        %v1406 = vadd.f32 0.0, %v1405
        %v1407 = vpop.f32.mrf.mxu0
        %v1408 = vadd.f32 0.0, %v1407
        %1409 = vmatmul.bf16.gmra.mxu0 %v1326
        %v1410 = vpop.f32.mrf.mxu0
        %v1411 = vadd.f32 0.0, %v1410
        %v1412 = vpop.f32.mrf.mxu0
        %v1413 = vadd.f32 0.0, %v1412
        %1414 = vmatmul.bf16.gmra.mxu0 %v1328
        %v1415 = vpop.f32.mrf.mxu0
        %v1416 = vadd.f32 0.0, %v1415
        %v1417 = vpop.f32.mrf.mxu0
        %v1418 = vadd.f32 0.0, %v1417
        %1419 = vmatmul.bf16.gmra.mxu0 %v1330
        %v1420 = vpop.f32.mrf.mxu0
        %v1421 = vadd.f32 0.0, %v1420
        %v1422 = vpop.f32.mrf.mxu0
        %v1423 = vadd.f32 0.0, %v1422
        %1424 = vdwg.mxu0
        %v1425 = vpack.c.bf16 %v1346, %v1346
        %v1426 = vpack.c.bf16 %v1348, %v1348
        %v1427 = vpack.c.bf16 %v1351, %v1351
        %v1428 = vpack.c.bf16 %v1353, %v1353
        %v1429 = vpack.c.bf16 %v1356, %v1356
        %v1430 = vpack.c.bf16 %v1358, %v1358
        %v1431 = vpack.c.bf16 %v1361, %v1361
        %v1432 = vpack.c.bf16 %v1363, %v1363
        %v1433 = vpack.c.bf16 %v1366, %v1366
        %v1434 = vpack.c.bf16 %v1368, %v1368
        %v1435 = vpack.c.bf16 %v1371, %v1371
        %v1436 = vpack.c.bf16 %v1373, %v1373
        %v1437 = vpack.c.bf16 %v1376, %v1376
        %v1438 = vpack.c.bf16 %v1378, %v1378
        %v1439 = vpack.c.bf16 %v1381, %v1381
        %v1440 = vpack.c.bf16 %v1383, %v1383
        %v1441 = vpack.c.bf16 %v1386, %v1386
        %v1442 = vpack.c.bf16 %v1388, %v1388
        %v1443 = vpack.c.bf16 %v1391, %v1391
        %v1444 = vpack.c.bf16 %v1393, %v1393
        %v1445 = vpack.c.bf16 %v1396, %v1396
        %v1446 = vpack.c.bf16 %v1398, %v1398
        %v1447 = vpack.c.bf16 %v1401, %v1401
        %v1448 = vpack.c.bf16 %v1403, %v1403
        %v1449 = vpack.c.bf16 %v1406, %v1406
        %v1450 = vpack.c.bf16 %v1408, %v1408
        %v1451 = vpack.c.bf16 %v1411, %v1411
        %v1452 = vpack.c.bf16 %v1413, %v1413
        %v1453 = vpack.c.bf16 %v1416, %v1416
        %v1454 = vpack.c.bf16 %v1418, %v1418
        %v1455 = vpack.c.bf16 %v1421, %v1421
        %v1456 = vpack.c.bf16 %v1423, %v1423
        %vm1457 = vcmask 60416
        %1458 = vst.msk [vmem:[%s181] sm:$0xf] %vm1457, %v1425
        %1459 = vst.msk [vmem:[%s181 + $0x4] sm:$0xf] %vm1457, %v1426
        %1460 = vst.msk [vmem:[%s181 + $0x8] sm:$0xf] %vm1457, %v1427
        %1461 = vst.msk [vmem:[%s181 + $0xc] sm:$0xf] %vm1457, %v1428
        %1462 = vst.msk [vmem:[%s181 + $0x10] sm:$0xf] %vm1457, %v1429
        %1463 = vst.msk [vmem:[%s181 + $0x14] sm:$0xf] %vm1457, %v1430
        %1464 = vst.msk [vmem:[%s181 + $0x18] sm:$0xf] %vm1457, %v1431
        %1465 = vst.msk [vmem:[%s181 + $0x1c] sm:$0xf] %vm1457, %v1432
        %1466 = vst.msk [vmem:[%s181 + $0x20] sm:$0xf] %vm1457, %v1433
        %1467 = vst.msk [vmem:[%s181 + $0x24] sm:$0xf] %vm1457, %v1434
        %1468 = vst.msk [vmem:[%s181 + $0x28] sm:$0xf] %vm1457, %v1435
        %1469 = vst.msk [vmem:[%s181 + $0x2c] sm:$0xf] %vm1457, %v1436
        %1470 = vst.msk [vmem:[%s181 + $0x30] sm:$0xf] %vm1457, %v1437
        %1471 = vst.msk [vmem:[%s181 + $0x34] sm:$0xf] %vm1457, %v1438
        %1472 = vst.msk [vmem:[%s181 + $0x38] sm:$0xf] %vm1457, %v1439
        %1473 = vst.msk [vmem:[%s181 + $0x3c] sm:$0xf] %vm1457, %v1440
        %1474 = vst.msk [vmem:[%s181 + $0x40] sm:$0xf] %vm1457, %v1441
        %1475 = vst.msk [vmem:[%s181 + $0x44] sm:$0xf] %vm1457, %v1442
        %1476 = vst.msk [vmem:[%s181 + $0x48] sm:$0xf] %vm1457, %v1443
        %1477 = vst.msk [vmem:[%s181 + $0x4c] sm:$0xf] %vm1457, %v1444
        %1478 = vst.msk [vmem:[%s181 + $0x50] sm:$0xf] %vm1457, %v1445
        %1479 = vst.msk [vmem:[%s181 + $0x54] sm:$0xf] %vm1457, %v1446
        %1480 = vst.msk [vmem:[%s181 + $0x58] sm:$0xf] %vm1457, %v1447
        %1481 = vst.msk [vmem:[%s181 + $0x5c] sm:$0xf] %vm1457, %v1448
        %1482 = vst.msk [vmem:[%s181 + $0x60] sm:$0xf] %vm1457, %v1449
        %1483 = vst.msk [vmem:[%s181 + $0x64] sm:$0xf] %vm1457, %v1450
        %1484 = vst.msk [vmem:[%s181 + $0x68] sm:$0xf] %vm1457, %v1451
        %1485 = vst.msk [vmem:[%s181 + $0x6c] sm:$0xf] %vm1457, %v1452
        %1486 = vst.msk [vmem:[%s181 + $0x70] sm:$0xf] %vm1457, %v1453
        %1487 = vst.msk [vmem:[%s181 + $0x74] sm:$0xf] %vm1457, %v1454
        %1488 = vst.msk [vmem:[%s181 + $0x78] sm:$0xf] %vm1457, %v1455
        %1489 = vst.msk [vmem:[%s181 + $0x7c] sm:$0xf] %vm1457, %v1456
        %1490 = vmatpush.msra.mxu0 %v1383
        %1491 = vmatpush.msra.mxu0 %v1381
        %1492 = vmatpush.msra.mxu0 %v1378
        %1493 = vmatpush.msra.mxu0 %v1376
        %1494 = vmatpush.msra.mxu0 %v1373
        %1495 = vmatpush.msra.mxu0 %v1371
        %1496 = vmatpush.msra.mxu0 %v1368
        %1497 = vmatpush.msra.mxu0 %v1366
        %1498 = vmatpush.msra.mxu0 %v1363
        %1499 = vmatpush.msra.mxu0 %v1361
        %1500 = vmatpush.msra.mxu0 %v1358
        %1501 = vmatpush.msra.mxu0 %v1356
        %1502 = vmatpush.msra.mxu0 %v1353
        %1503 = vmatpush.msra.mxu0 %v1351
        %1504 = vmatpush.msra.mxu0 %v1348
        %1505 = vmatpush.msra.mxu0 %v1346
        %1506 = vmatmul.f32.gmra.mxu0 1.0
        %v1507 = vpop.f32.mrf.mxu0
        %v1508 = vadd.f32 0.0, %v1507
        %1509 = vdwg.mxu0
        %1510 = vmatpush.msra.mxu0 %v1423
        %1511 = vmatpush.msra.mxu0 %v1421
        %1512 = vmatpush.msra.mxu0 %v1418
        %1513 = vmatpush.msra.mxu0 %v1416
        %1514 = vmatpush.msra.mxu0 %v1413
        %1515 = vmatpush.msra.mxu0 %v1411
        %1516 = vmatpush.msra.mxu0 %v1408
        %1517 = vmatpush.msra.mxu0 %v1406
        %1518 = vmatpush.msra.mxu0 %v1403
        %1519 = vmatpush.msra.mxu0 %v1401
        %1520 = vmatpush.msra.mxu0 %v1398
        %1521 = vmatpush.msra.mxu0 %v1396
        %1522 = vmatpush.msra.mxu0 %v1393
        %1523 = vmatpush.msra.mxu0 %v1391
        %1524 = vmatpush.msra.mxu0 %v1388
        %1525 = vmatpush.msra.mxu0 %v1386
        %1526 = vmatmul.f32.gmra.mxu0 1.0
        %v1527 = vpop.f32.mrf.mxu0
        %v1528 = vadd.f32 %v1508, %v1527
        %1529 = vdwg.mxu0
        %v1530 = vmul.f32 %v1528, 0.00390625
        %v1531 = vperm.slane %v1530, 0
        %v1532 = vsub.f32 %v1346, %v1531
        %v1533 = vsub.f32 %v1348, %v1531
        %v1534 = vsub.f32 %v1351, %v1531
        %v1535 = vsub.f32 %v1353, %v1531
        %v1536 = vsub.f32 %v1356, %v1531
        %v1537 = vsub.f32 %v1358, %v1531
        %v1538 = vsub.f32 %v1361, %v1531
        %v1539 = vsub.f32 %v1363, %v1531
        %v1540 = vsub.f32 %v1366, %v1531
        %v1541 = vsub.f32 %v1368, %v1531
        %v1542 = vsub.f32 %v1371, %v1531
        %v1543 = vsub.f32 %v1373, %v1531
        %v1544 = vsub.f32 %v1376, %v1531
        %v1545 = vsub.f32 %v1378, %v1531
        %v1546 = vsub.f32 %v1381, %v1531
        %v1547 = vsub.f32 %v1383, %v1531
        %v1548 = vsub.f32 %v1386, %v1531
        %v1549 = vsub.f32 %v1388, %v1531
        %v1550 = vsub.f32 %v1391, %v1531
        %v1551 = vsub.f32 %v1393, %v1531
        %v1552 = vsub.f32 %v1396, %v1531
        %v1553 = vsub.f32 %v1398, %v1531
        %v1554 = vsub.f32 %v1401, %v1531
        %v1555 = vsub.f32 %v1403, %v1531
        %v1556 = vsub.f32 %v1406, %v1531
        %v1557 = vsub.f32 %v1408, %v1531
        %v1558 = vsub.f32 %v1411, %v1531
        %v1559 = vsub.f32 %v1413, %v1531
        %v1560 = vsub.f32 %v1416, %v1531
        %v1561 = vsub.f32 %v1418, %v1531
        %v1562 = vsub.f32 %v1421, %v1531
        %v1563 = vsub.f32 %v1423, %v1531
        %v1564 = vmul.f32 %v1532, %v1532
        %v1565 = vmul.f32 %v1533, %v1533
        %v1566 = vmul.f32 %v1534, %v1534
        %v1567 = vmul.f32 %v1535, %v1535
        %v1568 = vmul.f32 %v1536, %v1536
        %v1569 = vmul.f32 %v1537, %v1537
        %v1570 = vmul.f32 %v1538, %v1538
        %v1571 = vmul.f32 %v1539, %v1539
        %v1572 = vmul.f32 %v1540, %v1540
        %v1573 = vmul.f32 %v1541, %v1541
        %v1574 = vmul.f32 %v1542, %v1542
        %v1575 = vmul.f32 %v1543, %v1543
        %v1576 = vmul.f32 %v1544, %v1544
        %v1577 = vmul.f32 %v1545, %v1545
        %v1578 = vmul.f32 %v1546, %v1546
        %v1579 = vmul.f32 %v1547, %v1547
        %v1580 = vmul.f32 %v1548, %v1548
        %v1581 = vmul.f32 %v1549, %v1549
        %v1582 = vmul.f32 %v1550, %v1550
        %v1583 = vmul.f32 %v1551, %v1551
        %v1584 = vmul.f32 %v1552, %v1552
        %v1585 = vmul.f32 %v1553, %v1553
        %v1586 = vmul.f32 %v1554, %v1554
        %v1587 = vmul.f32 %v1555, %v1555
        %v1588 = vmul.f32 %v1556, %v1556
        %v1589 = vmul.f32 %v1557, %v1557
        %v1590 = vmul.f32 %v1558, %v1558
        %v1591 = vmul.f32 %v1559, %v1559
        %v1592 = vmul.f32 %v1560, %v1560
        %v1593 = vmul.f32 %v1561, %v1561
        %v1594 = vmul.f32 %v1562, %v1562
        %v1595 = vmul.f32 %v1563, %v1563
        %1596 = vmatpush.msra.mxu0 %v1579
        %1597 = vmatpush.msra.mxu0 %v1578
        %1598 = vmatpush.msra.mxu0 %v1577
        %1599 = vmatpush.msra.mxu0 %v1576
        %1600 = vmatpush.msra.mxu0 %v1575
        %1601 = vmatpush.msra.mxu0 %v1574
        %1602 = vmatpush.msra.mxu0 %v1573
        %1603 = vmatpush.msra.mxu0 %v1572
        %1604 = vmatpush.msra.mxu0 %v1571
        %1605 = vmatpush.msra.mxu0 %v1570
        %1606 = vmatpush.msra.mxu0 %v1569
        %1607 = vmatpush.msra.mxu0 %v1568
        %1608 = vmatpush.msra.mxu0 %v1567
        %1609 = vmatpush.msra.mxu0 %v1566
        %1610 = vmatpush.msra.mxu0 %v1565
        %1611 = vmatpush.msra.mxu0 %v1564
        %1612 = vmatmul.f32.gmra.mxu0 1.0
        %v1613 = vpop.f32.mrf.mxu0
        %v1614 = vadd.f32 0.0, %v1613
        %1615 = vdwg.mxu0
        %1616 = vmatpush.msra.mxu0 %v1595
        %1617 = vmatpush.msra.mxu0 %v1594
        %1618 = vmatpush.msra.mxu0 %v1593
        %1619 = vmatpush.msra.mxu0 %v1592
        %1620 = vmatpush.msra.mxu0 %v1591
        %1621 = vmatpush.msra.mxu0 %v1590
        %1622 = vmatpush.msra.mxu0 %v1589
        %1623 = vmatpush.msra.mxu0 %v1588
        %1624 = vmatpush.msra.mxu0 %v1587
        %1625 = vmatpush.msra.mxu0 %v1586
        %1626 = vmatpush.msra.mxu0 %v1585
        %1627 = vmatpush.msra.mxu0 %v1584
        %1628 = vmatpush.msra.mxu0 %v1583
        %1629 = vmatpush.msra.mxu0 %v1582
        %1630 = vmatpush.msra.mxu0 %v1581
        %1631 = vmatpush.msra.mxu0 %v1580
        %1632 = vmatmul.f32.gmra.mxu0 1.0
        %v1633 = vpop.f32.mrf.mxu0
        %v1634 = vadd.f32 %v1614, %v1633
        %1635 = vdwg.mxu0
        %vm1636 = vcmask 57344
        %1637 = vst.msk [vmem:[%s171] sm:$0x1] %vm1636, %v1530
        %1638 = vst.msk [vmem:[%s171 + $0x1] sm:$0x1] %vm1636, %v1634
        %p1639 = scmp.lt.s32.totalorder %s18, 1
        %s1640 = scalar_select %p1639, %s18, 1
        %s1641 = smul.addr %s1640, 32
        %s1642 = smul.addr %s1641, 4
        %s1643 = scalar_lea.vmem %s2, %s1642
        %s1644 = sand.u32 %s99, 1
        %s1645 = scalar_lea.sflag [#allocation3], %s1644
        %s1646 = sand.u32 %s99, 1
        %s1647 = smul.addr %s1646, 2
        %s1648 = scalar_lea.vmem [#allocation2], %s1647
        // Predicated region
        $region29: #{tpu_custom_call.1} parent=27 // pred_check
          %p1649 = pneg %p83
        $region30: #{tpu_custom_call.1} parent=27 // pred_check_branch
          %1651 = sbr.rel (%p1649) target = $region32
        $region31: #{tpu_custom_call.1} parent=27 // pred_region
          _
        $region32: #{tpu_custom_call.1} parent=27 // pred_fallthru
          _
        // Predicated region
        $region33: #{tpu_custom_call.1} parent=27 // pred_check
          %p1652 = pneg %p109
        $region34: #{tpu_custom_call.1} parent=27 // pred_check_branch
          %1654 = sbr.rel (%p1652) target = $region36
        $region35: #{tpu_custom_call.1} parent=27 // pred_region
          %1656 = vsyncadd %s1645, 0
          %s1657 = smul.addr %s18, 2
          %s1658 = scalar_lea.hbm %s3, %s1657
          %s1660 = sshll.u32 %s1648, 4
          %s1661 = int_to_ptr.vmem [resolvable:$true] %s1660
          %s1662 = sshll.u32 %s1658, 4
          %s1663 = int_to_ptr.hbm [resolvable:$true] %s1662
          %1665 = dma.vmem_to_hbm [thread:$0]  %s1661, 32, %s1663, %s1645
        $region36: #{tpu_custom_call.1} parent=27 // pred_fallthru
          _
      $region28: #{tpu_custom_call.1} parent=5 // pred_fallthru
        _
      %p1666 = scmp.le.s32.totalorder 2, %s13
      // Predicated region
      $region37: #{tpu_custom_call.1} parent=5 // pred_check
        %p1667 = pneg %p1666
      $region38: #{tpu_custom_call.1} parent=5 // pred_check_branch
        %1669 = sbr.rel (%p1667) target = $region40
      $region39: #{tpu_custom_call.1} parent=5 // pred_region
        %s1670 = ssub.s32 %s13, 2
        // Predicated region
        $region41: #{tpu_custom_call.1} parent=39 // pred_check
          %p1671 = pneg %p89
        $region42: #{tpu_custom_call.1} parent=39 // pred_check_branch
          %1673 = sbr.rel (%p1671) target = $region44
        $region43: #{tpu_custom_call.1} parent=39 // pred_region
          %p1674 = scmp.lt.s32.totalorder %s19, 1
          %s1675 = scalar_select %p1674, %s19, 1
          %s1676 = smul.addr %s1675, 32
          %s1677 = smul.addr %s1676, 4
          %s1678 = scalar_lea.vmem %s2, %s1677
        $region44: #{tpu_custom_call.1} parent=39 // pred_fallthru
          _
        // Predicated region
        $region45: #{tpu_custom_call.1} parent=39 // pred_check
          %p1679 = pneg %p115
        $region46: #{tpu_custom_call.1} parent=39 // pred_check_branch
          %1681 = sbr.rel (%p1679) target = $region48
        $region47: #{tpu_custom_call.1} parent=39 // pred_region
          %s1682 = sand.u32 %s100, 1
          %s1683 = scalar_lea.sflag [#allocation3], %s1682
          %s1684 = sand.u32 %s100, 1
          %s1685 = smul.addr %s1684, 2
          %s1686 = scalar_lea.vmem [#allocation2], %s1685
          %1688 = dma.done %s1683, 32
        $region48: #{tpu_custom_call.1} parent=39 // pred_fallthru
          _
      $region40: #{tpu_custom_call.1} parent=5 // pred_fallthru
        _
    $region6: #{tpu_custom_call.1} parent=1 // loop_footer
      %s17 = sadd.s32 1, %s13
    $region7: #{tpu_custom_call.1} parent=1 // loop_footer_branch
      %12 = sbr.rel target = $region3
    $region8: #{tpu_custom_call.1} parent=1 // loop_exit
      _
    %1689 = vsyncpa [#allocation3], 1
    %s1690 = scalar_lea.sflag [#allocation3], 1
    %1691 = vsyncpa %s1690, 1

</llo_original>
